<compile_context>
chip_gen: v7x
topology: tpu7x:2x2x1
jax: 0.10.0
libtpu: 0.0.40
codegen_flags: <defaults>
</compile_context>

<pallas_src>
import functools

import jax
import jax.numpy as jnp
from jax.experimental import pallas as pl
from jax.experimental.pallas import tpu as pltpu

NEG_SLOPE = 0.01  # torch.nn.functional.leaky_relu default


def _fused_mlp_kernel(*refs, n_layers):
    """refs = (xT_ref, w0, b0, w1, b1, ..., w_{L-1}, b_{L-1}, oT_ref).

    xT_ref: (in_size, TB) activation tile — batch on the lane axis.
    w_i:    (out_i, in_i)  torch-native Linear weight layout.
    b_i:    (out_i, 1)     broadcasts over the batch lanes.
    oT_ref: (out_size, TB) lane-dense output tile.
    """
    x_ref = refs[0]
    o_ref = refs[-1]
    wb_refs = refs[1:-1]

    h = x_ref[...]
    # Statically unrolled layer loop: intermediates stay in vregs/VMEM.
    for layer in range(n_layers):
        w_ref = wb_refs[2 * layer]
        b_ref = wb_refs[2 * layer + 1]
        if layer > 0:
            # leaky_relu on the VPU (free vs. the MXU matmuls)
            h = jnp.where(h > 0, h, NEG_SLOPE * h)
        # (out_i, in_i) @ (in_i, TB) -> (out_i, TB); bias broadcasts over lanes.
        h = jnp.dot(w_ref[...], h,
                    preferred_element_type=jnp.float32,
                    precision=jax.lax.Precision.HIGHEST) + b_ref[...]
    o_ref[...] = h.astype(o_ref.dtype)


def _round_up(x, m):
    return ((x + m - 1) // m) * m


def nn_v_forward(params, x, *, batch_tile=None):
    """Fused forward pass of NN_V.

    params: list of (w, b) with w shaped (out, in) (torch layout) and b shaped (out, 1).
    x:      (B, in_size) float32.  Returns (B, out_size) float32.
    batch_tile: optional sweepable batch-tile size (columns per grid step).
    """
    B, K = x.shape
    n_layers = len(params)
    out_size = params[-1][0].shape[0]

    # Batch tile lives on the lane axis => must be a multiple of 128 unless a
    # single block covers the whole batch (block dim == array dim is allowed).
    if batch_tile is None:
        if B <= 256:
            tb = B
        else:
            # >=2 grid steps so both v7x TensorCores get work; cap at 2048
            # columns per step (per-step overhead, not VMEM, is the constraint).
            tb = min(_round_up(pl.cdiv(B, 2), 128), 2048)
    else:
        tb = B if batch_tile >= B else _round_up(batch_tile, 128)
    grid = pl.cdiv(B, tb)  # ragged last block is clipped by Pallas; no jnp.pad

    # Feature-major: one transpose in the wrapper, everything in-kernel is
    # lane-dense.
    xt = x.T  # (K, B)

    in_specs = [pl.BlockSpec((K, tb), lambda i: (0, i))]
    flat_params = []
    for w, b in params:
        flat_params.extend((w, b))
        # Tiny, constant-index full blocks; VMEM-resident every grid step.
        # (Single-buffering them via pipeline_mode would be a negligible win.)
        in_specs.append(pl.BlockSpec(w.shape, lambda i: (0, 0)))
        in_specs.append(pl.BlockSpec(b.shape, lambda i: (0, 0)))

    kernel = functools.partial(_fused_mlp_kernel, n_layers=n_layers)
    out_t = pl.pallas_call(
        kernel,
        out_shape=jax.ShapeDtypeStruct((out_size, B), jnp.float32),
        grid_spec=pl.GridSpec(
            grid=(grid,),
            in_specs=in_specs,
            out_specs=pl.BlockSpec((out_size, tb), lambda i: (0, i)),
        ),
        compiler_params=pltpu.CompilerParams(
            # Batch tiles are independent -> parallel (lets v7x use both TCs).
            dimension_semantics=("parallel",)),
    )(xt, *flat_params)

    return out_t.T  # (B, out_size)


def init_nn_v_params(key, in_size, out_size, layers):
    """Deterministic PyTorch-style Linear init: U(-1/sqrt(fan_in), 1/sqrt(fan_in)).

    Weights are kept in torch-native (out, in) layout; biases as (out, 1).
    """
    sizes = [in_size] + list(layers) + [out_size]
    params = []
    for i in range(len(sizes) - 1):
        fan_in, fan_out = sizes[i], sizes[i + 1]
        key, kw, kb = jax.random.split(key, 3)
        bound = 1.0 / jnp.sqrt(jnp.float32(fan_in))
        w = jax.random.uniform(kw, (fan_out, fan_in), jnp.float32, -bound, bound)
        b = jax.random.uniform(kb, (fan_out, 1), jnp.float32, -bound, bound)
        params.append((w, b))
    return params


def _reference(params, x):
    """Plain-JAX reference, same math as the PyTorch module."""
    ref = x @ params[0][0].T + params[0][1].T
    for w, b in params[1:]:
        ref = jnp.where(ref > 0, ref, NEG_SLOPE * ref) @ w.T + b.T
    return ref


if __name__ == "__main__":
    key = jax.random.PRNGKey(0)
    k_in, k_in2, k_param = jax.random.split(key, 3)

    # NN_V(inSize=16, outSize=1, layers=[32, 32])
    in_size, out_size, hidden = 16, 1, [32, 32]
    params = init_nn_v_params(k_param, in_size, out_size, hidden)

    # Small batch: single block path.
    batch = 8
    x = jax.random.normal(k_in, (batch, in_size), dtype=jnp.float32)
    out = jax.block_until_ready(nn_v_forward(params, x))
    ref = _reference(params, x)
    assert out.shape == (batch, out_size)
    assert jnp.allclose(out, ref, atol=1e-5, rtol=1e-5)

    # Larger, non-divisible batch with an explicit tile: exercises the
    # multi-step grid and the ragged (clipped) last block.
    batch2 = 200
    x2 = jax.random.normal(k_in2, (batch2, in_size), dtype=jnp.float32)
    out2 = jax.block_until_ready(nn_v_forward(params, x2, batch_tile=128))
    ref2 = _reference(params, x2)
    assert out2.shape == (batch2, out_size)
    assert jnp.allclose(out2, ref2, atol=1e-5, rtol=1e-5)

    print("KERNEL_OK")
</pallas_src>

<mosaic_0001>
module attributes {stable_mosaic.version = 11 : i64} {
  func.func @_fused_mlp_kernel(%arg0: i32, %arg1: memref<16x8xf32, #tpu.memory_space<vmem>>, %arg2: memref<32x16xf32, #tpu.memory_space<vmem>>, %arg3: memref<32x1xf32, #tpu.memory_space<vmem>>, %arg4: memref<32x32xf32, #tpu.memory_space<vmem>>, %arg5: memref<32x1xf32, #tpu.memory_space<vmem>>, %arg6: memref<1x32xf32, #tpu.memory_space<vmem>>, %arg7: memref<1x1xf32, #tpu.memory_space<vmem>>, %arg8: memref<1x8xf32, #tpu.memory_space<vmem>>) attributes {dimension_semantics = [#tpu.dimension_semantics<parallel>], iteration_bounds = array<i64: 1>, scalar_prefetch = 0 : i64, scratch_operands = 0 : i64, tpu.core_type = #tpu.core_type<tc>, window_params = [{transform_indices = @transform_0, window_bounds = array<i64: 16, 8>}, {pipeline_mode = #tpu.pipeline_mode<synchronous>, transform_indices = @transform_1, window_bounds = array<i64: 32, 16>}, {pipeline_mode = #tpu.pipeline_mode<synchronous>, transform_indices = @transform_2, window_bounds = array<i64: 32, 1>}, {pipeline_mode = #tpu.pipeline_mode<synchronous>, transform_indices = @transform_3, window_bounds = array<i64: 32, 32>}, {pipeline_mode = #tpu.pipeline_mode<synchronous>, transform_indices = @transform_4, window_bounds = array<i64: 32, 1>}, {pipeline_mode = #tpu.pipeline_mode<synchronous>, transform_indices = @transform_5, window_bounds = array<i64: 1, 32>}, {pipeline_mode = #tpu.pipeline_mode<synchronous>, transform_indices = @transform_6, window_bounds = array<i64: 1, 1>}, {transform_indices = @transform_7, window_bounds = array<i64: 1, 8>}]} {
    %c0 = arith.constant 0 : index
    %c0_0 = arith.constant 0 : index
    %0 = vector.load %arg1[%c0, %c0_0] : memref<16x8xf32, #tpu.memory_space<vmem>>, vector<16x8xf32>
    %c0_1 = arith.constant 0 : index
    %c0_2 = arith.constant 0 : index
    %1 = vector.load %arg2[%c0_1, %c0_2] : memref<32x16xf32, #tpu.memory_space<vmem>>, vector<32x16xf32>
    %cst = arith.constant dense<0.000000e+00> : vector<32x8xf32>
    %2 = tpu.matmul %1, %0, %cst {dimension_numbers = #tpu.dot_dimension_numbers<[1], [0], [0], [1], [0, 0, 1, 1], [], []>, precision = #tpu.contract_precision<fp32>} : vector<32x16xf32>, vector<16x8xf32>, vector<32x8xf32> -> vector<32x8xf32>
    %c0_3 = arith.constant 0 : index
    %c0_4 = arith.constant 0 : index
    %3 = vector.load %arg3[%c0_3, %c0_4] : memref<32x1xf32, #tpu.memory_space<vmem>>, vector<32x1xf32>
    %4 = vector.broadcast %3 : vector<32x1xf32> to vector<32x8xf32>
    %5 = arith.addf %2, %4 : vector<32x8xf32>
    %cst_5 = arith.constant 0.000000e+00 : f32
    %6 = vector.broadcast %cst_5 : f32 to vector<32x8xf32>
    %7 = arith.cmpf ogt, %5, %6 : vector<32x8xf32>
    %cst_6 = arith.constant 0.00999999977 : f32
    %8 = vector.broadcast %cst_6 : f32 to vector<32x8xf32>
    %9 = arith.mulf %8, %5 : vector<32x8xf32>
    %10 = arith.select %7, %5, %9 : vector<32x8xi1>, vector<32x8xf32>
    %c0_7 = arith.constant 0 : index
    %c0_8 = arith.constant 0 : index
    %11 = vector.load %arg4[%c0_7, %c0_8] : memref<32x32xf32, #tpu.memory_space<vmem>>, vector<32x32xf32>
    %cst_9 = arith.constant dense<0.000000e+00> : vector<32x8xf32>
    %12 = tpu.matmul %11, %10, %cst_9 {dimension_numbers = #tpu.dot_dimension_numbers<[1], [0], [0], [1], [0, 0, 1, 1], [], []>, precision = #tpu.contract_precision<fp32>} : vector<32x32xf32>, vector<32x8xf32>, vector<32x8xf32> -> vector<32x8xf32>
    %c0_10 = arith.constant 0 : index
    %c0_11 = arith.constant 0 : index
    %13 = vector.load %arg5[%c0_10, %c0_11] : memref<32x1xf32, #tpu.memory_space<vmem>>, vector<32x1xf32>
    %14 = vector.broadcast %13 : vector<32x1xf32> to vector<32x8xf32>
    %15 = arith.addf %12, %14 : vector<32x8xf32>
    %cst_12 = arith.constant 0.000000e+00 : f32
    %16 = vector.broadcast %cst_12 : f32 to vector<32x8xf32>
    %17 = arith.cmpf ogt, %15, %16 : vector<32x8xf32>
    %cst_13 = arith.constant 0.00999999977 : f32
    %18 = vector.broadcast %cst_13 : f32 to vector<32x8xf32>
    %19 = arith.mulf %18, %15 : vector<32x8xf32>
    %20 = arith.select %17, %15, %19 : vector<32x8xi1>, vector<32x8xf32>
    %c0_14 = arith.constant 0 : index
    %c0_15 = arith.constant 0 : index
    %21 = vector.load %arg6[%c0_14, %c0_15] : memref<1x32xf32, #tpu.memory_space<vmem>>, vector<1x32xf32>
    %cst_16 = arith.constant dense<0.000000e+00> : vector<1x8xf32>
    %22 = tpu.matmul %21, %20, %cst_16 {dimension_numbers = #tpu.dot_dimension_numbers<[1], [0], [0], [1], [0, 0, 1, 1], [], []>, precision = #tpu.contract_precision<fp32>} : vector<1x32xf32>, vector<32x8xf32>, vector<1x8xf32> -> vector<1x8xf32>
    %c0_17 = arith.constant 0 : index
    %c0_18 = arith.constant 0 : index
    %23 = vector.load %arg7[%c0_17, %c0_18] : memref<1x1xf32, #tpu.memory_space<vmem>>, vector<1x1xf32>
    %24 = vector.broadcast %23 : vector<1x1xf32> to vector<1x8xf32>
    %25 = arith.addf %22, %24 : vector<1x8xf32>
    %c0_19 = arith.constant 0 : index
    %c0_20 = arith.constant 0 : index
    %26 = vector.load %arg8[%c0_19, %c0_20] : memref<1x8xf32, #tpu.memory_space<vmem>>, vector<1x8xf32>
    tpu.vector_store %arg8[%c0_19, %c0_20], %25 {strides = array<i32>} : memref<1x8xf32, #tpu.memory_space<vmem>>, vector<1x8xf32>,
    return
  }
  func.func @transform_0(%arg0: i32) -> (i32, i32) {
    %c0_i32 = arith.constant 0 : i32
    %c0_i32_0 = arith.constant 0 : i32
    return %c0_i32, %arg0 : i32, i32
  }
  func.func @transform_1(%arg0: i32) -> (i32, i32) {
    %c0_i32 = arith.constant 0 : i32
    %c0_i32_0 = arith.constant 0 : i32
    %c0_i32_1 = arith.constant 0 : i32
    return %c0_i32, %c0_i32_0 : i32, i32
  }
  func.func @transform_2(%arg0: i32) -> (i32, i32) {
    %c0_i32 = arith.constant 0 : i32
    %c0_i32_0 = arith.constant 0 : i32
    %c0_i32_1 = arith.constant 0 : i32
    return %c0_i32, %c0_i32_0 : i32, i32
  }
  func.func @transform_3(%arg0: i32) -> (i32, i32) {
    %c0_i32 = arith.constant 0 : i32
    %c0_i32_0 = arith.constant 0 : i32
    %c0_i32_1 = arith.constant 0 : i32
    return %c0_i32, %c0_i32_0 : i32, i32
  }
  func.func @transform_4(%arg0: i32) -> (i32, i32) {
    %c0_i32 = arith.constant 0 : i32
    %c0_i32_0 = arith.constant 0 : i32
    %c0_i32_1 = arith.constant 0 : i32
    return %c0_i32, %c0_i32_0 : i32, i32
  }
  func.func @transform_5(%arg0: i32) -> (i32, i32) {
    %c0_i32 = arith.constant 0 : i32
    %c0_i32_0 = arith.constant 0 : i32
    %c0_i32_1 = arith.constant 0 : i32
    return %c0_i32, %c0_i32_0 : i32, i32
  }
  func.func @transform_6(%arg0: i32) -> (i32, i32) {
    %c0_i32 = arith.constant 0 : i32
    %c0_i32_0 = arith.constant 0 : i32
    %c0_i32_1 = arith.constant 0 : i32
    return %c0_i32, %c0_i32_0 : i32, i32
  }
  func.func @transform_7(%arg0: i32) -> (i32, i32) {
    %c0_i32 = arith.constant 0 : i32
    %c0_i32_0 = arith.constant 0 : i32
    return %c0_i32, %arg0 : i32, i32
  }
}

</mosaic_0001>

<llo_original>
// kernel: tpu_custom_call.1
$region0: #{tpu_custom_call.1}
  #allocation0 [shape = 'u32[]', space=smem, size = 0x4, offset = 0x4, fixed_abs, tag = 'smem constant byte address 0x4 - core index']
  #allocation1 [shape = 'u32[144,128]{1,0:T(1,128)}', space=vmem, size = 0x12000, scoped, tag = 'internal scratch']
  #allocation2 [shape = 'f32[1,1]{1,0:T(1,128)S(1)}', space=vmem, size = 0x200, scoped, tag = 'scoped memory for tpu_custom_call.1']
  %s0 = inlined_call_operand.vmem [shape: f32[16,8], index: 0, kind: input, shape index: {}]
  %s1 = inlined_call_operand.vmem [shape: f32[32,16], index: 1, kind: input, shape index: {}]
  %s2 = inlined_call_operand.vmem [shape: f32[32,1], index: 2, kind: input, shape index: {}]
  %s3 = inlined_call_operand.vmem [shape: f32[32,32], index: 3, kind: input, shape index: {}]
  %s4 = inlined_call_operand.vmem [shape: f32[32,1], index: 4, kind: input, shape index: {}]
  %s5 = inlined_call_operand.vmem [shape: f32[1,32], index: 5, kind: input, shape index: {}]
  %s6 = inlined_call_operand.<no memory space> [shape: f32[1,1], index: 6, kind: input, shape index: {}]
  %s7 = inlined_call_operand.hbm [shape: f32[1,8], index: 7, kind: output, shape index: {}]
  %s8 = sld [smem:[#allocation0]]
  $region38: #{tpu_custom_call.1} parent=0
    _
  %s10 = ssub.s32 1, %s8
  %s11 = scalar_select 0, %s10, %s8
  %v12 = vstv %s6
  %13 = vst [vmem:[#allocation2] sm:$0x1] %v12
  $region1: #{tpu_custom_call.1} parent=0
    #allocation3 [shape = 'u8[512]{0}', space=vmem, size = 0x400, scoped, tag = 'output window, operand 0, single buffered']
    #allocation4 [shape = 's32[1]{0}', space=sflag, size = 0x4, scoped, tag = 'scoped memory for tpu_custom_call.1']
    %14 = vsyncpa [#allocation4], 0
    // Predicated region
    $region2: #{tpu_custom_call.1} parent=1 // pred_check
      _
    $region3: #{tpu_custom_call.1} parent=1 // pred_check_branch
      %16 = sbr.rel (0) target = $region5
    $region4: #{tpu_custom_call.1} parent=1 // pred_region
      _
    $region5: #{tpu_custom_call.1} parent=1 // pred_fallthru
      _
    // Predicated region
    $region6: #{tpu_custom_call.1} parent=1 // pred_check
      _
    $region7: #{tpu_custom_call.1} parent=1 // pred_check_branch
      %18 = sbr.rel (0) target = $region9
    $region8: #{tpu_custom_call.1} parent=1 // pred_region
      _
    $region9: #{tpu_custom_call.1} parent=1 // pred_fallthru
      _
    // Predicated region
    $region10: #{tpu_custom_call.1} parent=1 // pred_check
      _
    $region11: #{tpu_custom_call.1} parent=1 // pred_check_branch
      %20 = sbr.rel (0) target = $region13
    $region12: #{tpu_custom_call.1} parent=1 // pred_region
      _
    $region13: #{tpu_custom_call.1} parent=1 // pred_fallthru
      _
    // Predicated region
    $region14: #{tpu_custom_call.1} parent=1 // pred_check
      _
    $region15: #{tpu_custom_call.1} parent=1 // pred_check_branch
      %22 = sbr.rel (0) target = $region17
    $region16: #{tpu_custom_call.1} parent=1 // pred_region
      _
    $region17: #{tpu_custom_call.1} parent=1 // pred_fallthru
      _
    // Predicated region
    $region18: #{tpu_custom_call.1} parent=1 // pred_check
      _
    $region19: #{tpu_custom_call.1} parent=1 // pred_check_branch
      %24 = sbr.rel (0) target = $region21
    $region20: #{tpu_custom_call.1} parent=1 // pred_region
      _
    $region21: #{tpu_custom_call.1} parent=1 // pred_fallthru
      _
    // Predicated region
    $region22: #{tpu_custom_call.1} parent=1 // pred_check
      _
    $region23: #{tpu_custom_call.1} parent=1 // pred_check_branch
      %26 = sbr.rel (0) target = $region25
    $region24: #{tpu_custom_call.1} parent=1 // pred_region
      _
    $region25: #{tpu_custom_call.1} parent=1 // pred_fallthru
      _
    // Predicated region
    $region26: #{tpu_custom_call.1} parent=1 // pred_check
      _
    $region27: #{tpu_custom_call.1} parent=1 // pred_check_branch
      %28 = sbr.rel (0) target = $region29
    $region28: #{tpu_custom_call.1} parent=1 // pred_region
      _
    $region29: #{tpu_custom_call.1} parent=1 // pred_fallthru
      _
    %v29 = vld [vmem:[%s0] sm:$0xff]
    %v30 = vld [vmem:[%s0 + $0x8] sm:$0xff]
    %v31 = vld [vmem:[%s1] sm:$0xff]
    %v32 = vld [vmem:[%s1 + $0x8] sm:$0xff]
    %v33 = vld [vmem:[%s1 + $0x10] sm:$0xff]
    %v34 = vld [vmem:[%s1 + $0x18] sm:$0xff]
    %v35 = vld [vmem:[%s2] sm:$0xff]
    %v36 = vld [vmem:[%s2 + $0x8] sm:$0xff]
    %v37 = vld [vmem:[%s2 + $0x10] sm:$0xff]
    %v38 = vld [vmem:[%s2 + $0x18] sm:$0xff]
    %40 = vset.pattern.permute.xlu0 0
    %41 = vperm.xlu0 %40, %v35
    %v42 = vpop.permute.xlu0 %41
    %45 = vset.pattern.permute.xlu0 0
    %46 = vperm.xlu0 %45, %v36
    %v47 = vpop.permute.xlu0 %46
    %50 = vset.pattern.permute.xlu0 0
    %51 = vperm.xlu0 %50, %v37
    %v52 = vpop.permute.xlu0 %51
    %55 = vset.pattern.permute.xlu0 0
    %56 = vperm.xlu0 %55, %v38
    %v57 = vpop.permute.xlu0 %56
    %vm59 = vcmask 130048
    %v61 = vsel %vm59, %v31, 0
    %v64 = vsel %vm59, %v32, 0
    %v67 = vsel %vm59, %v33, 0
    %v70 = vsel %vm59, %v34, 0
    %72 = vmatprep.subr.mxu0 0.0
    %v73 = vand.u32 %v29, 4294901760
    %74 = vmatpush1.msra.mxu0 %v73
    %75 = vmatprep.subr.mxu0 0.0
    %v76 = vand.u32 %v30, 4294901760
    %77 = vmatpush1.msra.mxu0 %v76
    %78 = vmatprep.subr.mxu0 0.0
    %79 = vmatpush1.msra.mxu0 0.0
    %80 = vmatprep.subr.mxu0 0.0
    %81 = vmatpush1.msra.mxu0 0.0
    %82 = vmatprep.subr.mxu0 0.0
    %83 = vmatpush1.msra.mxu0 0.0
    %84 = vmatprep.subr.mxu0 0.0
    %85 = vmatpush1.msra.mxu0 0.0
    %86 = vmatprep.subr.mxu0 0.0
    %87 = vmatpush1.msra.mxu0 0.0
    %88 = vmatprep.subr.mxu0 0.0
    %89 = vmatpush1.msra.mxu0 0.0
    %90 = vmatprep.subr.mxu0 0.0
    %91 = vmatpush1.msra.mxu0 0.0
    %92 = vmatprep.subr.mxu0 0.0
    %93 = vmatpush1.msra.mxu0 0.0
    %94 = vmatprep.subr.mxu0 0.0
    %95 = vmatpush1.msra.mxu0 0.0
    %96 = vmatprep.subr.mxu0 0.0
    %97 = vmatpush1.msra.mxu0 0.0
    %98 = vmatprep.subr.mxu0 0.0
    %99 = vmatpush1.msra.mxu0 0.0
    %100 = vmatprep.subr.mxu0 0.0
    %101 = vmatpush1.msra.mxu0 0.0
    %102 = vmatprep.subr.mxu0 0.0
    %103 = vmatpush1.msra.mxu0 0.0
    %104 = vmatprep.subr.mxu0 0.0
    %105 = vmatpush1.msra.mxu0 0.0
    %106 = vmatprep.subr.mxu0 0.0
    %107 = vmatpush1.msra.mxu0 0.0
    %108 = vmatprep.subr.mxu0 0.0
    %109 = vmatpush1.msra.mxu0 0.0
    %110 = vmatprep.subr.mxu0 0.0
    %111 = vmatpush1.msra.mxu0 0.0
    %112 = vmatprep.subr.mxu0 0.0
    %113 = vmatpush1.msra.mxu0 0.0
    %114 = vmatprep.subr.mxu0 0.0
    %115 = vmatpush1.msra.mxu0 0.0
    %116 = vmatprep.subr.mxu0 0.0
    %117 = vmatpush1.msra.mxu0 0.0
    %118 = vmatprep.subr.mxu0 0.0
    %119 = vmatpush1.msra.mxu0 0.0
    %120 = vmatprep.subr.mxu0 0.0
    %121 = vmatpush1.msra.mxu0 0.0
    %122 = vmatprep.subr.mxu0 0.0
    %123 = vmatpush1.msra.mxu0 0.0
    %124 = vmatprep.subr.mxu0 0.0
    %125 = vmatpush1.msra.mxu0 0.0
    %126 = vmatprep.subr.mxu0 0.0
    %127 = vmatpush1.msra.mxu0 0.0
    %128 = vmatprep.subr.mxu0 0.0
    %129 = vmatpush1.msra.mxu0 0.0
    %130 = vmatprep.subr.mxu0 0.0
    %131 = vmatpush1.msra.mxu0 0.0
    %132 = vmatprep.subr.mxu0 0.0
    %133 = vmatpush1.msra.mxu0 0.0
    %134 = vmatprep.subr.mxu0 0.0
    %135 = vmatpush1.msra.mxu0 0.0
    %136 = vmatprep.subr.mxu0 0.0
    %137 = vmatpush1.msra.mxu0 0.0
    %138 = vmatprep.mubr.f32.mxu0 0.0
    %v139 = vand.u32 %v61, 4294901760
    %v140 = vsub.f32 %v61, %v139
    %v141 = vand.u32 %v140, 4294901760
    %v142 = vsub.f32 %v140, %v141
    %v143 = vand.u32 %v142, 4294901760
    %144 = vmatmul.mubr.f32.gmra.mrb[0].mxu0 %v143
    %v145 = vpop.f32.mrb[0].mxu0
    %v146 = vadd.f32 %v42, %v145
    %v147 = vpop.f32.mrb[0].mxu0
    %148 = vmatprep.mubr.f32.mxu0 0.0
    %v149 = vand.u32 %v64, 4294901760
    %v150 = vsub.f32 %v64, %v149
    %v151 = vand.u32 %v150, 4294901760
    %v152 = vsub.f32 %v150, %v151
    %v153 = vand.u32 %v152, 4294901760
    %154 = vmatmul.mubr.f32.gmra.mrb[0].mxu0 %v153
    %v155 = vpop.f32.mrb[0].mxu0
    %v156 = vadd.f32 %v47, %v155
    %v157 = vpop.f32.mrb[0].mxu0
    %158 = vmatprep.mubr.f32.mxu0 0.0
    %v159 = vand.u32 %v67, 4294901760
    %v160 = vsub.f32 %v67, %v159
    %v161 = vand.u32 %v160, 4294901760
    %v162 = vsub.f32 %v160, %v161
    %v163 = vand.u32 %v162, 4294901760
    %164 = vmatmul.mubr.f32.gmra.mrb[0].mxu0 %v163
    %v165 = vpop.f32.mrb[0].mxu0
    %v166 = vadd.f32 %v52, %v165
    %v167 = vpop.f32.mrb[0].mxu0
    %168 = vmatprep.mubr.f32.mxu0 0.0
    %v169 = vand.u32 %v70, 4294901760
    %v170 = vsub.f32 %v70, %v169
    %v171 = vand.u32 %v170, 4294901760
    %v172 = vsub.f32 %v170, %v171
    %v173 = vand.u32 %v172, 4294901760
    %174 = vmatmul.mubr.f32.gmra.mrb[0].mxu0 %v173
    %v175 = vpop.f32.mrb[0].mxu0
    %v176 = vadd.f32 %v57, %v175
    %v177 = vpop.f32.mrb[0].mxu0
    %178 = vdwg.mxu0
    %179 = vmatprep.subr.mxu0 0.0
    %v180 = vand.u32 %v29, 4294901760
    %v181 = vsub.f32 %v29, %v180
    %v182 = vand.u32 %v181, 4294901760
    %v183 = vsub.f32 %v181, %v182
    %v184 = vand.u32 %v183, 4294901760
    %185 = vmatpush1.msra.mxu0 %v184
    %186 = vmatprep.subr.mxu0 0.0
    %v187 = vand.u32 %v30, 4294901760
    %v188 = vsub.f32 %v30, %v187
    %v189 = vand.u32 %v188, 4294901760
    %v190 = vsub.f32 %v188, %v189
    %v191 = vand.u32 %v190, 4294901760
    %192 = vmatpush1.msra.mxu0 %v191
    %193 = vmatprep.subr.mxu0 0.0
    %194 = vmatpush1.msra.mxu0 0.0
    %195 = vmatprep.subr.mxu0 0.0
    %196 = vmatpush1.msra.mxu0 0.0
    %197 = vmatprep.subr.mxu0 0.0
    %198 = vmatpush1.msra.mxu0 0.0
    %199 = vmatprep.subr.mxu0 0.0
    %200 = vmatpush1.msra.mxu0 0.0
    %201 = vmatprep.subr.mxu0 0.0
    %202 = vmatpush1.msra.mxu0 0.0
    %203 = vmatprep.subr.mxu0 0.0
    %204 = vmatpush1.msra.mxu0 0.0
    %205 = vmatprep.subr.mxu0 0.0
    %206 = vmatpush1.msra.mxu0 0.0
    %207 = vmatprep.subr.mxu0 0.0
    %208 = vmatpush1.msra.mxu0 0.0
    %209 = vmatprep.subr.mxu0 0.0
    %210 = vmatpush1.msra.mxu0 0.0
    %211 = vmatprep.subr.mxu0 0.0
    %212 = vmatpush1.msra.mxu0 0.0
    %213 = vmatprep.subr.mxu0 0.0
    %214 = vmatpush1.msra.mxu0 0.0
    %215 = vmatprep.subr.mxu0 0.0
    %216 = vmatpush1.msra.mxu0 0.0
    %217 = vmatprep.subr.mxu0 0.0
    %218 = vmatpush1.msra.mxu0 0.0
    %219 = vmatprep.subr.mxu0 0.0
    %220 = vmatpush1.msra.mxu0 0.0
    %221 = vmatprep.subr.mxu0 0.0
    %222 = vmatpush1.msra.mxu0 0.0
    %223 = vmatprep.subr.mxu0 0.0
    %224 = vmatpush1.msra.mxu0 0.0
    %225 = vmatprep.subr.mxu0 0.0
    %226 = vmatpush1.msra.mxu0 0.0
    %227 = vmatprep.subr.mxu0 0.0
    %228 = vmatpush1.msra.mxu0 0.0
    %229 = vmatprep.subr.mxu0 0.0
    %230 = vmatpush1.msra.mxu0 0.0
    %231 = vmatprep.subr.mxu0 0.0
    %232 = vmatpush1.msra.mxu0 0.0
    %233 = vmatprep.subr.mxu0 0.0
    %234 = vmatpush1.msra.mxu0 0.0
    %235 = vmatprep.subr.mxu0 0.0
    %236 = vmatpush1.msra.mxu0 0.0
    %237 = vmatprep.subr.mxu0 0.0
    %238 = vmatpush1.msra.mxu0 0.0
    %239 = vmatprep.subr.mxu0 0.0
    %240 = vmatpush1.msra.mxu0 0.0
    %241 = vmatprep.subr.mxu0 0.0
    %242 = vmatpush1.msra.mxu0 0.0
    %243 = vmatprep.subr.mxu0 0.0
    %244 = vmatpush1.msra.mxu0 0.0
    %245 = vmatprep.subr.mxu0 0.0
    %246 = vmatpush1.msra.mxu0 0.0
    %247 = vmatprep.subr.mxu0 0.0
    %248 = vmatpush1.msra.mxu0 0.0
    %249 = vmatprep.subr.mxu0 0.0
    %250 = vmatpush1.msra.mxu0 0.0
    %251 = vmatprep.subr.mxu0 0.0
    %252 = vmatpush1.msra.mxu0 0.0
    %253 = vmatprep.mubr.f32.mxu0 0.0
    %v254 = vand.u32 %v61, 4294901760
    %255 = vmatmul.mubr.f32.gmra.mrb[0].mxu0 %v254
    %v256 = vpop.f32.mrb[0].mxu0
    %v257 = vadd.f32 %v146, %v256
    %v258 = vpop.f32.mrb[0].mxu0
    %259 = vmatprep.mubr.f32.mxu0 0.0
    %v260 = vand.u32 %v64, 4294901760
    %261 = vmatmul.mubr.f32.gmra.mrb[0].mxu0 %v260
    %v262 = vpop.f32.mrb[0].mxu0
    %v263 = vadd.f32 %v156, %v262
    %v264 = vpop.f32.mrb[0].mxu0
    %265 = vmatprep.mubr.f32.mxu0 0.0
    %v266 = vand.u32 %v67, 4294901760
    %267 = vmatmul.mubr.f32.gmra.mrb[0].mxu0 %v266
    %v268 = vpop.f32.mrb[0].mxu0
    %v269 = vadd.f32 %v166, %v268
    %v270 = vpop.f32.mrb[0].mxu0
    %271 = vmatprep.mubr.f32.mxu0 0.0
    %v272 = vand.u32 %v70, 4294901760
    %273 = vmatmul.mubr.f32.gmra.mrb[0].mxu0 %v272
    %v274 = vpop.f32.mrb[0].mxu0
    %v275 = vadd.f32 %v176, %v274
    %v276 = vpop.f32.mrb[0].mxu0
    %277 = vdwg.mxu0
    %278 = vmatprep.subr.mxu0 0.0
    %v279 = vand.u32 %v29, 4294901760
    %v280 = vsub.f32 %v29, %v279
    %281 = vmatpush1.msra.mxu0 %v280
    %282 = vmatprep.subr.mxu0 0.0
    %v283 = vand.u32 %v30, 4294901760
    %v284 = vsub.f32 %v30, %v283
    %285 = vmatpush1.msra.mxu0 %v284
    %286 = vmatprep.subr.mxu0 0.0
    %287 = vmatpush1.msra.mxu0 0.0
    %288 = vmatprep.subr.mxu0 0.0
    %289 = vmatpush1.msra.mxu0 0.0
    %290 = vmatprep.subr.mxu0 0.0
    %291 = vmatpush1.msra.mxu0 0.0
    %292 = vmatprep.subr.mxu0 0.0
    %293 = vmatpush1.msra.mxu0 0.0
    %294 = vmatprep.subr.mxu0 0.0
    %295 = vmatpush1.msra.mxu0 0.0
    %296 = vmatprep.subr.mxu0 0.0
    %297 = vmatpush1.msra.mxu0 0.0
    %298 = vmatprep.subr.mxu0 0.0
    %299 = vmatpush1.msra.mxu0 0.0
    %300 = vmatprep.subr.mxu0 0.0
    %301 = vmatpush1.msra.mxu0 0.0
    %302 = vmatprep.subr.mxu0 0.0
    %303 = vmatpush1.msra.mxu0 0.0
    %304 = vmatprep.subr.mxu0 0.0
    %305 = vmatpush1.msra.mxu0 0.0
    %306 = vmatprep.subr.mxu0 0.0
    %307 = vmatpush1.msra.mxu0 0.0
    %308 = vmatprep.subr.mxu0 0.0
    %309 = vmatpush1.msra.mxu0 0.0
    %310 = vmatprep.subr.mxu0 0.0
    %311 = vmatpush1.msra.mxu0 0.0
    %312 = vmatprep.subr.mxu0 0.0
    %313 = vmatpush1.msra.mxu0 0.0
    %314 = vmatprep.subr.mxu0 0.0
    %315 = vmatpush1.msra.mxu0 0.0
    %316 = vmatprep.subr.mxu0 0.0
    %317 = vmatpush1.msra.mxu0 0.0
    %318 = vmatprep.subr.mxu0 0.0
    %319 = vmatpush1.msra.mxu0 0.0
    %320 = vmatprep.subr.mxu0 0.0
    %321 = vmatpush1.msra.mxu0 0.0
    %322 = vmatprep.subr.mxu0 0.0
    %323 = vmatpush1.msra.mxu0 0.0
    %324 = vmatprep.subr.mxu0 0.0
    %325 = vmatpush1.msra.mxu0 0.0
    %326 = vmatprep.subr.mxu0 0.0
    %327 = vmatpush1.msra.mxu0 0.0
    %328 = vmatprep.subr.mxu0 0.0
    %329 = vmatpush1.msra.mxu0 0.0
    %330 = vmatprep.subr.mxu0 0.0
    %331 = vmatpush1.msra.mxu0 0.0
    %332 = vmatprep.subr.mxu0 0.0
    %333 = vmatpush1.msra.mxu0 0.0
    %334 = vmatprep.subr.mxu0 0.0
    %335 = vmatpush1.msra.mxu0 0.0
    %336 = vmatprep.subr.mxu0 0.0
    %337 = vmatpush1.msra.mxu0 0.0
    %338 = vmatprep.subr.mxu0 0.0
    %339 = vmatpush1.msra.mxu0 0.0
    %340 = vmatprep.subr.mxu0 0.0
    %341 = vmatpush1.msra.mxu0 0.0
    %342 = vmatprep.subr.mxu0 0.0
    %343 = vmatpush1.msra.mxu0 0.0
    %344 = vmatprep.subr.mxu0 0.0
    %345 = vmatpush1.msra.mxu0 0.0
    %346 = vmatprep.mubr.f32.mxu0 0.0
    %v347 = vand.u32 %v61, 4294901760
    %v348 = vsub.f32 %v61, %v347
    %349 = vmatmul.mubr.f32.gmra.mrb[0].mxu0 %v348
    %v350 = vpop.f32.mrb[0].mxu0
    %v351 = vadd.f32 %v257, %v350
    %v352 = vpop.f32.mrb[0].mxu0
    %353 = vmatprep.mubr.f32.mxu0 0.0
    %v354 = vand.u32 %v64, 4294901760
    %v355 = vsub.f32 %v64, %v354
    %356 = vmatmul.mubr.f32.gmra.mrb[0].mxu0 %v355
    %v357 = vpop.f32.mrb[0].mxu0
    %v358 = vadd.f32 %v263, %v357
    %v359 = vpop.f32.mrb[0].mxu0
    %360 = vmatprep.mubr.f32.mxu0 0.0
    %v361 = vand.u32 %v67, 4294901760
    %v362 = vsub.f32 %v67, %v361
    %363 = vmatmul.mubr.f32.gmra.mrb[0].mxu0 %v362
    %v364 = vpop.f32.mrb[0].mxu0
    %v365 = vadd.f32 %v269, %v364
    %v366 = vpop.f32.mrb[0].mxu0
    %367 = vmatprep.mubr.f32.mxu0 0.0
    %v368 = vand.u32 %v70, 4294901760
    %v369 = vsub.f32 %v70, %v368
    %370 = vmatmul.mubr.f32.gmra.mrb[0].mxu0 %v369
    %v371 = vpop.f32.mrb[0].mxu0
    %v372 = vadd.f32 %v275, %v371
    %v373 = vpop.f32.mrb[0].mxu0
    %374 = vdwg.mxu0
    %375 = vmatprep.subr.mxu0 0.0
    %v376 = vand.u32 %v29, 4294901760
    %377 = vmatpush1.msra.mxu0 %v376
    %378 = vmatprep.subr.mxu0 0.0
    %v379 = vand.u32 %v30, 4294901760
    %380 = vmatpush1.msra.mxu0 %v379
    %381 = vmatprep.subr.mxu0 0.0
    %382 = vmatpush1.msra.mxu0 0.0
    %383 = vmatprep.subr.mxu0 0.0
    %384 = vmatpush1.msra.mxu0 0.0
    %385 = vmatprep.subr.mxu0 0.0
    %386 = vmatpush1.msra.mxu0 0.0
    %387 = vmatprep.subr.mxu0 0.0
    %388 = vmatpush1.msra.mxu0 0.0
    %389 = vmatprep.subr.mxu0 0.0
    %390 = vmatpush1.msra.mxu0 0.0
    %391 = vmatprep.subr.mxu0 0.0
    %392 = vmatpush1.msra.mxu0 0.0
    %393 = vmatprep.subr.mxu0 0.0
    %394 = vmatpush1.msra.mxu0 0.0
    %395 = vmatprep.subr.mxu0 0.0
    %396 = vmatpush1.msra.mxu0 0.0
    %397 = vmatprep.subr.mxu0 0.0
    %398 = vmatpush1.msra.mxu0 0.0
    %399 = vmatprep.subr.mxu0 0.0
    %400 = vmatpush1.msra.mxu0 0.0
    %401 = vmatprep.subr.mxu0 0.0
    %402 = vmatpush1.msra.mxu0 0.0
    %403 = vmatprep.subr.mxu0 0.0
    %404 = vmatpush1.msra.mxu0 0.0
    %405 = vmatprep.subr.mxu0 0.0
    %406 = vmatpush1.msra.mxu0 0.0
    %407 = vmatprep.subr.mxu0 0.0
    %408 = vmatpush1.msra.mxu0 0.0
    %409 = vmatprep.subr.mxu0 0.0
    %410 = vmatpush1.msra.mxu0 0.0
    %411 = vmatprep.subr.mxu0 0.0
    %412 = vmatpush1.msra.mxu0 0.0
    %413 = vmatprep.subr.mxu0 0.0
    %414 = vmatpush1.msra.mxu0 0.0
    %415 = vmatprep.subr.mxu0 0.0
    %416 = vmatpush1.msra.mxu0 0.0
    %417 = vmatprep.subr.mxu0 0.0
    %418 = vmatpush1.msra.mxu0 0.0
    %419 = vmatprep.subr.mxu0 0.0
    %420 = vmatpush1.msra.mxu0 0.0
    %421 = vmatprep.subr.mxu0 0.0
    %422 = vmatpush1.msra.mxu0 0.0
    %423 = vmatprep.subr.mxu0 0.0
    %424 = vmatpush1.msra.mxu0 0.0
    %425 = vmatprep.subr.mxu0 0.0
    %426 = vmatpush1.msra.mxu0 0.0
    %427 = vmatprep.subr.mxu0 0.0
    %428 = vmatpush1.msra.mxu0 0.0
    %429 = vmatprep.subr.mxu0 0.0
    %430 = vmatpush1.msra.mxu0 0.0
    %431 = vmatprep.subr.mxu0 0.0
    %432 = vmatpush1.msra.mxu0 0.0
    %433 = vmatprep.subr.mxu0 0.0
    %434 = vmatpush1.msra.mxu0 0.0
    %435 = vmatprep.subr.mxu0 0.0
    %436 = vmatpush1.msra.mxu0 0.0
    %437 = vmatprep.subr.mxu0 0.0
    %438 = vmatpush1.msra.mxu0 0.0
    %439 = vmatprep.subr.mxu0 0.0
    %440 = vmatpush1.msra.mxu0 0.0
    %441 = vmatprep.mubr.f32.mxu0 0.0
    %v442 = vand.u32 %v61, 4294901760
    %v443 = vsub.f32 %v61, %v442
    %v444 = vand.u32 %v443, 4294901760
    %445 = vmatmul.mubr.f32.gmra.mrb[0].mxu0 %v444
    %v446 = vpop.f32.mrb[0].mxu0
    %v447 = vadd.f32 %v351, %v446
    %v448 = vpop.f32.mrb[0].mxu0
    %449 = vmatprep.mubr.f32.mxu0 0.0
    %v450 = vand.u32 %v64, 4294901760
    %v451 = vsub.f32 %v64, %v450
    %v452 = vand.u32 %v451, 4294901760
    %453 = vmatmul.mubr.f32.gmra.mrb[0].mxu0 %v452
    %v454 = vpop.f32.mrb[0].mxu0
    %v455 = vadd.f32 %v358, %v454
    %v456 = vpop.f32.mrb[0].mxu0
    %457 = vmatprep.mubr.f32.mxu0 0.0
    %v458 = vand.u32 %v67, 4294901760
    %v459 = vsub.f32 %v67, %v458
    %v460 = vand.u32 %v459, 4294901760
    %461 = vmatmul.mubr.f32.gmra.mrb[0].mxu0 %v460
    %v462 = vpop.f32.mrb[0].mxu0
    %v463 = vadd.f32 %v365, %v462
    %v464 = vpop.f32.mrb[0].mxu0
    %465 = vmatprep.mubr.f32.mxu0 0.0
    %v466 = vand.u32 %v70, 4294901760
    %v467 = vsub.f32 %v70, %v466
    %v468 = vand.u32 %v467, 4294901760
    %469 = vmatmul.mubr.f32.gmra.mrb[0].mxu0 %v468
    %v470 = vpop.f32.mrb[0].mxu0
    %v471 = vadd.f32 %v372, %v470
    %v472 = vpop.f32.mrb[0].mxu0
    %473 = vdwg.mxu0
    %474 = vmatprep.subr.mxu0 0.0
    %v475 = vand.u32 %v29, 4294901760
    %v476 = vsub.f32 %v29, %v475
    %v477 = vand.u32 %v476, 4294901760
    %478 = vmatpush1.msra.mxu0 %v477
    %479 = vmatprep.subr.mxu0 0.0
    %v480 = vand.u32 %v30, 4294901760
    %v481 = vsub.f32 %v30, %v480
    %v482 = vand.u32 %v481, 4294901760
    %483 = vmatpush1.msra.mxu0 %v482
    %484 = vmatprep.subr.mxu0 0.0
    %485 = vmatpush1.msra.mxu0 0.0
    %486 = vmatprep.subr.mxu0 0.0
    %487 = vmatpush1.msra.mxu0 0.0
    %488 = vmatprep.subr.mxu0 0.0
    %489 = vmatpush1.msra.mxu0 0.0
    %490 = vmatprep.subr.mxu0 0.0
    %491 = vmatpush1.msra.mxu0 0.0
    %492 = vmatprep.subr.mxu0 0.0
    %493 = vmatpush1.msra.mxu0 0.0
    %494 = vmatprep.subr.mxu0 0.0
    %495 = vmatpush1.msra.mxu0 0.0
    %496 = vmatprep.subr.mxu0 0.0
    %497 = vmatpush1.msra.mxu0 0.0
    %498 = vmatprep.subr.mxu0 0.0
    %499 = vmatpush1.msra.mxu0 0.0
    %500 = vmatprep.subr.mxu0 0.0
    %501 = vmatpush1.msra.mxu0 0.0
    %502 = vmatprep.subr.mxu0 0.0
    %503 = vmatpush1.msra.mxu0 0.0
    %504 = vmatprep.subr.mxu0 0.0
    %505 = vmatpush1.msra.mxu0 0.0
    %506 = vmatprep.subr.mxu0 0.0
    %507 = vmatpush1.msra.mxu0 0.0
    %508 = vmatprep.subr.mxu0 0.0
    %509 = vmatpush1.msra.mxu0 0.0
    %510 = vmatprep.subr.mxu0 0.0
    %511 = vmatpush1.msra.mxu0 0.0
    %512 = vmatprep.subr.mxu0 0.0
    %513 = vmatpush1.msra.mxu0 0.0
    %514 = vmatprep.subr.mxu0 0.0
    %515 = vmatpush1.msra.mxu0 0.0
    %516 = vmatprep.subr.mxu0 0.0
    %517 = vmatpush1.msra.mxu0 0.0
    %518 = vmatprep.subr.mxu0 0.0
    %519 = vmatpush1.msra.mxu0 0.0
    %520 = vmatprep.subr.mxu0 0.0
    %521 = vmatpush1.msra.mxu0 0.0
    %522 = vmatprep.subr.mxu0 0.0
    %523 = vmatpush1.msra.mxu0 0.0
    %524 = vmatprep.subr.mxu0 0.0
    %525 = vmatpush1.msra.mxu0 0.0
    %526 = vmatprep.subr.mxu0 0.0
    %527 = vmatpush1.msra.mxu0 0.0
    %528 = vmatprep.subr.mxu0 0.0
    %529 = vmatpush1.msra.mxu0 0.0
    %530 = vmatprep.subr.mxu0 0.0
    %531 = vmatpush1.msra.mxu0 0.0
    %532 = vmatprep.subr.mxu0 0.0
    %533 = vmatpush1.msra.mxu0 0.0
    %534 = vmatprep.subr.mxu0 0.0
    %535 = vmatpush1.msra.mxu0 0.0
    %536 = vmatprep.subr.mxu0 0.0
    %537 = vmatpush1.msra.mxu0 0.0
    %538 = vmatprep.subr.mxu0 0.0
    %539 = vmatpush1.msra.mxu0 0.0
    %540 = vmatprep.subr.mxu0 0.0
    %541 = vmatpush1.msra.mxu0 0.0
    %542 = vmatprep.subr.mxu0 0.0
    %543 = vmatpush1.msra.mxu0 0.0
    %544 = vmatprep.mubr.f32.mxu0 0.0
    %v545 = vand.u32 %v61, 4294901760
    %546 = vmatmul.mubr.f32.gmra.mrb[0].mxu0 %v545
    %v547 = vpop.f32.mrb[0].mxu0
    %v548 = vadd.f32 %v447, %v547
    %v549 = vpop.f32.mrb[0].mxu0
    %550 = vmatprep.mubr.f32.mxu0 0.0
    %v551 = vand.u32 %v64, 4294901760
    %552 = vmatmul.mubr.f32.gmra.mrb[0].mxu0 %v551
    %v553 = vpop.f32.mrb[0].mxu0
    %v554 = vadd.f32 %v455, %v553
    %v555 = vpop.f32.mrb[0].mxu0
    %556 = vmatprep.mubr.f32.mxu0 0.0
    %v557 = vand.u32 %v67, 4294901760
    %558 = vmatmul.mubr.f32.gmra.mrb[0].mxu0 %v557
    %v559 = vpop.f32.mrb[0].mxu0
    %v560 = vadd.f32 %v463, %v559
    %v561 = vpop.f32.mrb[0].mxu0
    %562 = vmatprep.mubr.f32.mxu0 0.0
    %v563 = vand.u32 %v70, 4294901760
    %564 = vmatmul.mubr.f32.gmra.mrb[0].mxu0 %v563
    %v565 = vpop.f32.mrb[0].mxu0
    %v566 = vadd.f32 %v471, %v565
    %v567 = vpop.f32.mrb[0].mxu0
    %568 = vdwg.mxu0
    %569 = vmatprep.subr.mxu0 0.0
    %v570 = vand.u32 %v29, 4294901760
    %571 = vmatpush1.msra.mxu0 %v570
    %572 = vmatprep.subr.mxu0 0.0
    %v573 = vand.u32 %v30, 4294901760
    %574 = vmatpush1.msra.mxu0 %v573
    %575 = vmatprep.subr.mxu0 0.0
    %576 = vmatpush1.msra.mxu0 0.0
    %577 = vmatprep.subr.mxu0 0.0
    %578 = vmatpush1.msra.mxu0 0.0
    %579 = vmatprep.subr.mxu0 0.0
    %580 = vmatpush1.msra.mxu0 0.0
    %581 = vmatprep.subr.mxu0 0.0
    %582 = vmatpush1.msra.mxu0 0.0
    %583 = vmatprep.subr.mxu0 0.0
    %584 = vmatpush1.msra.mxu0 0.0
    %585 = vmatprep.subr.mxu0 0.0
    %586 = vmatpush1.msra.mxu0 0.0
    %587 = vmatprep.subr.mxu0 0.0
    %588 = vmatpush1.msra.mxu0 0.0
    %589 = vmatprep.subr.mxu0 0.0
    %590 = vmatpush1.msra.mxu0 0.0
    %591 = vmatprep.subr.mxu0 0.0
    %592 = vmatpush1.msra.mxu0 0.0
    %593 = vmatprep.subr.mxu0 0.0
    %594 = vmatpush1.msra.mxu0 0.0
    %595 = vmatprep.subr.mxu0 0.0
    %596 = vmatpush1.msra.mxu0 0.0
    %597 = vmatprep.subr.mxu0 0.0
    %598 = vmatpush1.msra.mxu0 0.0
    %599 = vmatprep.subr.mxu0 0.0
    %600 = vmatpush1.msra.mxu0 0.0
    %601 = vmatprep.subr.mxu0 0.0
    %602 = vmatpush1.msra.mxu0 0.0
    %603 = vmatprep.subr.mxu0 0.0
    %604 = vmatpush1.msra.mxu0 0.0
    %605 = vmatprep.subr.mxu0 0.0
    %606 = vmatpush1.msra.mxu0 0.0
    %607 = vmatprep.subr.mxu0 0.0
    %608 = vmatpush1.msra.mxu0 0.0
    %609 = vmatprep.subr.mxu0 0.0
    %610 = vmatpush1.msra.mxu0 0.0
    %611 = vmatprep.subr.mxu0 0.0
    %612 = vmatpush1.msra.mxu0 0.0
    %613 = vmatprep.subr.mxu0 0.0
    %614 = vmatpush1.msra.mxu0 0.0
    %615 = vmatprep.subr.mxu0 0.0
    %616 = vmatpush1.msra.mxu0 0.0
    %617 = vmatprep.subr.mxu0 0.0
    %618 = vmatpush1.msra.mxu0 0.0
    %619 = vmatprep.subr.mxu0 0.0
    %620 = vmatpush1.msra.mxu0 0.0
    %621 = vmatprep.subr.mxu0 0.0
    %622 = vmatpush1.msra.mxu0 0.0
    %623 = vmatprep.subr.mxu0 0.0
    %624 = vmatpush1.msra.mxu0 0.0
    %625 = vmatprep.subr.mxu0 0.0
    %626 = vmatpush1.msra.mxu0 0.0
    %627 = vmatprep.subr.mxu0 0.0
    %628 = vmatpush1.msra.mxu0 0.0
    %629 = vmatprep.subr.mxu0 0.0
    %630 = vmatpush1.msra.mxu0 0.0
    %631 = vmatprep.subr.mxu0 0.0
    %632 = vmatpush1.msra.mxu0 0.0
    %633 = vmatprep.subr.mxu0 0.0
    %634 = vmatpush1.msra.mxu0 0.0
    %635 = vmatprep.mubr.f32.mxu0 0.0
    %v636 = vand.u32 %v61, 4294901760
    %637 = vmatmul.mubr.f32.gmra.mrb[0].mxu0 %v636
    %v638 = vpop.f32.mrb[0].mxu0
    %v639 = vadd.f32 %v548, %v638
    %v640 = vpop.f32.mrb[0].mxu0
    %641 = vmatprep.mubr.f32.mxu0 0.0
    %v642 = vand.u32 %v64, 4294901760
    %643 = vmatmul.mubr.f32.gmra.mrb[0].mxu0 %v642
    %v644 = vpop.f32.mrb[0].mxu0
    %v645 = vadd.f32 %v554, %v644
    %v646 = vpop.f32.mrb[0].mxu0
    %647 = vmatprep.mubr.f32.mxu0 0.0
    %v648 = vand.u32 %v67, 4294901760
    %649 = vmatmul.mubr.f32.gmra.mrb[0].mxu0 %v648
    %v650 = vpop.f32.mrb[0].mxu0
    %v651 = vadd.f32 %v560, %v650
    %v652 = vpop.f32.mrb[0].mxu0
    %653 = vmatprep.mubr.f32.mxu0 0.0
    %v654 = vand.u32 %v70, 4294901760
    %655 = vmatmul.mubr.f32.gmra.mrb[0].mxu0 %v654
    %v656 = vpop.f32.mrb[0].mxu0
    %v657 = vadd.f32 %v566, %v656
    %v658 = vpop.f32.mrb[0].mxu0
    %659 = vdwg.mxu0
    %vm660 = vcmp.gt.f32.partialorder %v639, 0.0
    %vm661 = vcmp.gt.f32.partialorder %v645, 0.0
    %vm662 = vcmp.gt.f32.partialorder %v651, 0.0
    %vm663 = vcmp.gt.f32.partialorder %v657, 0.0
    %v664 = vmul.f32 %v639, 0.01
    %v665 = vmul.f32 %v645, 0.01
    %v666 = vmul.f32 %v651, 0.01
    %v667 = vmul.f32 %v657, 0.01
    %v668 = vsel %vm660, %v639, %v664
    %v669 = vsel %vm661, %v645, %v665
    %v670 = vsel %vm662, %v651, %v666
    %v671 = vsel %vm663, %v657, %v667
    %v672 = vld [vmem:[%s3] sm:$0xff]
    %v673 = vld [vmem:[%s3 + $0x8] sm:$0xff]
    %v674 = vld [vmem:[%s3 + $0x10] sm:$0xff]
    %v675 = vld [vmem:[%s3 + $0x18] sm:$0xff]
    %v676 = vld [vmem:[%s4] sm:$0xff]
    %v677 = vld [vmem:[%s4 + $0x8] sm:$0xff]
    %v678 = vld [vmem:[%s4 + $0x10] sm:$0xff]
    %v679 = vld [vmem:[%s4 + $0x18] sm:$0xff]
    %681 = vset.pattern.permute.xlu0 0
    %682 = vperm.xlu0 %681, %v676
    %v683 = vpop.permute.xlu0 %682
    %686 = vset.pattern.permute.xlu0 0
    %687 = vperm.xlu0 %686, %v677
    %v688 = vpop.permute.xlu0 %687
    %691 = vset.pattern.permute.xlu0 0
    %692 = vperm.xlu0 %691, %v678
    %v693 = vpop.permute.xlu0 %692
    %696 = vset.pattern.permute.xlu0 0
    %697 = vperm.xlu0 %696, %v679
    %v698 = vpop.permute.xlu0 %697
    %vm700 = vcmask 261120
    %v702 = vsel %vm700, %v672, 0
    %v705 = vsel %vm700, %v673, 0
    %v708 = vsel %vm700, %v674, 0
    %v711 = vsel %vm700, %v675, 0
    %713 = vmatprep.subr.mxu0 0.0
    %v714 = vand.u32 %v668, 4294901760
    %715 = vmatpush1.msra.mxu0 %v714
    %716 = vmatprep.subr.mxu0 0.0
    %v717 = vand.u32 %v669, 4294901760
    %718 = vmatpush1.msra.mxu0 %v717
    %719 = vmatprep.subr.mxu0 0.0
    %v720 = vand.u32 %v670, 4294901760
    %721 = vmatpush1.msra.mxu0 %v720
    %722 = vmatprep.subr.mxu0 0.0
    %v723 = vand.u32 %v671, 4294901760
    %724 = vmatpush1.msra.mxu0 %v723
    %725 = vmatprep.subr.mxu0 0.0
    %726 = vmatpush1.msra.mxu0 0.0
    %727 = vmatprep.subr.mxu0 0.0
    %728 = vmatpush1.msra.mxu0 0.0
    %729 = vmatprep.subr.mxu0 0.0
    %730 = vmatpush1.msra.mxu0 0.0
    %731 = vmatprep.subr.mxu0 0.0
    %732 = vmatpush1.msra.mxu0 0.0
    %733 = vmatprep.subr.mxu0 0.0
    %734 = vmatpush1.msra.mxu0 0.0
    %735 = vmatprep.subr.mxu0 0.0
    %736 = vmatpush1.msra.mxu0 0.0
    %737 = vmatprep.subr.mxu0 0.0
    %738 = vmatpush1.msra.mxu0 0.0
    %739 = vmatprep.subr.mxu0 0.0
    %740 = vmatpush1.msra.mxu0 0.0
    %741 = vmatprep.subr.mxu0 0.0
    %742 = vmatpush1.msra.mxu0 0.0
    %743 = vmatprep.subr.mxu0 0.0
    %744 = vmatpush1.msra.mxu0 0.0
    %745 = vmatprep.subr.mxu0 0.0
    %746 = vmatpush1.msra.mxu0 0.0
    %747 = vmatprep.subr.mxu0 0.0
    %748 = vmatpush1.msra.mxu0 0.0
    %749 = vmatprep.subr.mxu0 0.0
    %750 = vmatpush1.msra.mxu0 0.0
    %751 = vmatprep.subr.mxu0 0.0
    %752 = vmatpush1.msra.mxu0 0.0
    %753 = vmatprep.subr.mxu0 0.0
    %754 = vmatpush1.msra.mxu0 0.0
    %755 = vmatprep.subr.mxu0 0.0
    %756 = vmatpush1.msra.mxu0 0.0
    %757 = vmatprep.subr.mxu0 0.0
    %758 = vmatpush1.msra.mxu0 0.0
    %759 = vmatprep.subr.mxu0 0.0
    %760 = vmatpush1.msra.mxu0 0.0
    %761 = vmatprep.subr.mxu0 0.0
    %762 = vmatpush1.msra.mxu0 0.0
    %763 = vmatprep.subr.mxu0 0.0
    %764 = vmatpush1.msra.mxu0 0.0
    %765 = vmatprep.subr.mxu0 0.0
    %766 = vmatpush1.msra.mxu0 0.0
    %767 = vmatprep.subr.mxu0 0.0
    %768 = vmatpush1.msra.mxu0 0.0
    %769 = vmatprep.subr.mxu0 0.0
    %770 = vmatpush1.msra.mxu0 0.0
    %771 = vmatprep.subr.mxu0 0.0
    %772 = vmatpush1.msra.mxu0 0.0
    %773 = vmatprep.subr.mxu0 0.0
    %774 = vmatpush1.msra.mxu0 0.0
    %775 = vmatprep.subr.mxu0 0.0
    %776 = vmatpush1.msra.mxu0 0.0
    %777 = vmatprep.subr.mxu0 0.0
    %778 = vmatpush1.msra.mxu0 0.0
    %779 = vmatprep.subr.mxu0 0.0
    %780 = vmatpush1.msra.mxu0 0.0
    %781 = vmatprep.mubr.f32.mxu0 0.0
    %v782 = vand.u32 %v702, 4294901760
    %v783 = vsub.f32 %v702, %v782
    %v784 = vand.u32 %v783, 4294901760
    %v785 = vsub.f32 %v783, %v784
    %v786 = vand.u32 %v785, 4294901760
    %787 = vmatmul.mubr.f32.gmra.mrb[0].mxu0 %v786
    %v788 = vpop.f32.mrb[0].mxu0
    %v789 = vadd.f32 %v683, %v788
    %v790 = vpop.f32.mrb[0].mxu0
    %791 = vmatprep.mubr.f32.mxu0 0.0
    %v792 = vand.u32 %v705, 4294901760
    %v793 = vsub.f32 %v705, %v792
    %v794 = vand.u32 %v793, 4294901760
    %v795 = vsub.f32 %v793, %v794
    %v796 = vand.u32 %v795, 4294901760
    %797 = vmatmul.mubr.f32.gmra.mrb[0].mxu0 %v796
    %v798 = vpop.f32.mrb[0].mxu0
    %v799 = vadd.f32 %v688, %v798
    %v800 = vpop.f32.mrb[0].mxu0
    %801 = vmatprep.mubr.f32.mxu0 0.0
    %v802 = vand.u32 %v708, 4294901760
    %v803 = vsub.f32 %v708, %v802
    %v804 = vand.u32 %v803, 4294901760
    %v805 = vsub.f32 %v803, %v804
    %v806 = vand.u32 %v805, 4294901760
    %807 = vmatmul.mubr.f32.gmra.mrb[0].mxu0 %v806
    %v808 = vpop.f32.mrb[0].mxu0
    %v809 = vadd.f32 %v693, %v808
    %v810 = vpop.f32.mrb[0].mxu0
    %811 = vmatprep.mubr.f32.mxu0 0.0
    %v812 = vand.u32 %v711, 4294901760
    %v813 = vsub.f32 %v711, %v812
    %v814 = vand.u32 %v813, 4294901760
    %v815 = vsub.f32 %v813, %v814
    %v816 = vand.u32 %v815, 4294901760
    %817 = vmatmul.mubr.f32.gmra.mrb[0].mxu0 %v816
    %v818 = vpop.f32.mrb[0].mxu0
    %v819 = vadd.f32 %v698, %v818
    %v820 = vpop.f32.mrb[0].mxu0
    %821 = vdwg.mxu0
    %822 = vmatprep.subr.mxu0 0.0
    %v823 = vand.u32 %v668, 4294901760
    %v824 = vsub.f32 %v668, %v823
    %v825 = vand.u32 %v824, 4294901760
    %v826 = vsub.f32 %v824, %v825
    %v827 = vand.u32 %v826, 4294901760
    %828 = vmatpush1.msra.mxu0 %v827
    %829 = vmatprep.subr.mxu0 0.0
    %v830 = vand.u32 %v669, 4294901760
    %v831 = vsub.f32 %v669, %v830
    %v832 = vand.u32 %v831, 4294901760
    %v833 = vsub.f32 %v831, %v832
    %v834 = vand.u32 %v833, 4294901760
    %835 = vmatpush1.msra.mxu0 %v834
    %836 = vmatprep.subr.mxu0 0.0
    %v837 = vand.u32 %v670, 4294901760
    %v838 = vsub.f32 %v670, %v837
    %v839 = vand.u32 %v838, 4294901760
    %v840 = vsub.f32 %v838, %v839
    %v841 = vand.u32 %v840, 4294901760
    %842 = vmatpush1.msra.mxu0 %v841
    %843 = vmatprep.subr.mxu0 0.0
    %v844 = vand.u32 %v671, 4294901760
    %v845 = vsub.f32 %v671, %v844
    %v846 = vand.u32 %v845, 4294901760
    %v847 = vsub.f32 %v845, %v846
    %v848 = vand.u32 %v847, 4294901760
    %849 = vmatpush1.msra.mxu0 %v848
    %850 = vmatprep.subr.mxu0 0.0
    %851 = vmatpush1.msra.mxu0 0.0
    %852 = vmatprep.subr.mxu0 0.0
    %853 = vmatpush1.msra.mxu0 0.0
    %854 = vmatprep.subr.mxu0 0.0
    %855 = vmatpush1.msra.mxu0 0.0
    %856 = vmatprep.subr.mxu0 0.0
    %857 = vmatpush1.msra.mxu0 0.0
    %858 = vmatprep.subr.mxu0 0.0
    %859 = vmatpush1.msra.mxu0 0.0
    %860 = vmatprep.subr.mxu0 0.0
    %861 = vmatpush1.msra.mxu0 0.0
    %862 = vmatprep.subr.mxu0 0.0
    %863 = vmatpush1.msra.mxu0 0.0
    %864 = vmatprep.subr.mxu0 0.0
    %865 = vmatpush1.msra.mxu0 0.0
    %866 = vmatprep.subr.mxu0 0.0
    %867 = vmatpush1.msra.mxu0 0.0
    %868 = vmatprep.subr.mxu0 0.0
    %869 = vmatpush1.msra.mxu0 0.0
    %870 = vmatprep.subr.mxu0 0.0
    %871 = vmatpush1.msra.mxu0 0.0
    %872 = vmatprep.subr.mxu0 0.0
    %873 = vmatpush1.msra.mxu0 0.0
    %874 = vmatprep.subr.mxu0 0.0
    %875 = vmatpush1.msra.mxu0 0.0
    %876 = vmatprep.subr.mxu0 0.0
    %877 = vmatpush1.msra.mxu0 0.0
    %878 = vmatprep.subr.mxu0 0.0
    %879 = vmatpush1.msra.mxu0 0.0
    %880 = vmatprep.subr.mxu0 0.0
    %881 = vmatpush1.msra.mxu0 0.0
    %882 = vmatprep.subr.mxu0 0.0
    %883 = vmatpush1.msra.mxu0 0.0
    %884 = vmatprep.subr.mxu0 0.0
    %885 = vmatpush1.msra.mxu0 0.0
    %886 = vmatprep.subr.mxu0 0.0
    %887 = vmatpush1.msra.mxu0 0.0
    %888 = vmatprep.subr.mxu0 0.0
    %889 = vmatpush1.msra.mxu0 0.0
    %890 = vmatprep.subr.mxu0 0.0
    %891 = vmatpush1.msra.mxu0 0.0
    %892 = vmatprep.subr.mxu0 0.0
    %893 = vmatpush1.msra.mxu0 0.0
    %894 = vmatprep.subr.mxu0 0.0
    %895 = vmatpush1.msra.mxu0 0.0
    %896 = vmatprep.subr.mxu0 0.0
    %897 = vmatpush1.msra.mxu0 0.0
    %898 = vmatprep.subr.mxu0 0.0
    %899 = vmatpush1.msra.mxu0 0.0
    %900 = vmatprep.subr.mxu0 0.0
    %901 = vmatpush1.msra.mxu0 0.0
    %902 = vmatprep.subr.mxu0 0.0
    %903 = vmatpush1.msra.mxu0 0.0
    %904 = vmatprep.subr.mxu0 0.0
    %905 = vmatpush1.msra.mxu0 0.0
    %906 = vmatprep.mubr.f32.mxu0 0.0
    %v907 = vand.u32 %v702, 4294901760
    %908 = vmatmul.mubr.f32.gmra.mrb[0].mxu0 %v907
    %v909 = vpop.f32.mrb[0].mxu0
    %v910 = vadd.f32 %v789, %v909
    %v911 = vpop.f32.mrb[0].mxu0
    %912 = vmatprep.mubr.f32.mxu0 0.0
    %v913 = vand.u32 %v705, 4294901760
    %914 = vmatmul.mubr.f32.gmra.mrb[0].mxu0 %v913
    %v915 = vpop.f32.mrb[0].mxu0
    %v916 = vadd.f32 %v799, %v915
    %v917 = vpop.f32.mrb[0].mxu0
    %918 = vmatprep.mubr.f32.mxu0 0.0
    %v919 = vand.u32 %v708, 4294901760
    %920 = vmatmul.mubr.f32.gmra.mrb[0].mxu0 %v919
    %v921 = vpop.f32.mrb[0].mxu0
    %v922 = vadd.f32 %v809, %v921
    %v923 = vpop.f32.mrb[0].mxu0
    %924 = vmatprep.mubr.f32.mxu0 0.0
    %v925 = vand.u32 %v711, 4294901760
    %926 = vmatmul.mubr.f32.gmra.mrb[0].mxu0 %v925
    %v927 = vpop.f32.mrb[0].mxu0
    %v928 = vadd.f32 %v819, %v927
    %v929 = vpop.f32.mrb[0].mxu0
    %930 = vdwg.mxu0
    %931 = vmatprep.subr.mxu0 0.0
    %v932 = vand.u32 %v668, 4294901760
    %v933 = vsub.f32 %v668, %v932
    %934 = vmatpush1.msra.mxu0 %v933
    %935 = vmatprep.subr.mxu0 0.0
    %v936 = vand.u32 %v669, 4294901760
    %v937 = vsub.f32 %v669, %v936
    %938 = vmatpush1.msra.mxu0 %v937
    %939 = vmatprep.subr.mxu0 0.0
    %v940 = vand.u32 %v670, 4294901760
    %v941 = vsub.f32 %v670, %v940
    %942 = vmatpush1.msra.mxu0 %v941
    %943 = vmatprep.subr.mxu0 0.0
    %v944 = vand.u32 %v671, 4294901760
    %v945 = vsub.f32 %v671, %v944
    %946 = vmatpush1.msra.mxu0 %v945
    %947 = vmatprep.subr.mxu0 0.0
    %948 = vmatpush1.msra.mxu0 0.0
    %949 = vmatprep.subr.mxu0 0.0
    %950 = vmatpush1.msra.mxu0 0.0
    %951 = vmatprep.subr.mxu0 0.0
    %952 = vmatpush1.msra.mxu0 0.0
    %953 = vmatprep.subr.mxu0 0.0
    %954 = vmatpush1.msra.mxu0 0.0
    %955 = vmatprep.subr.mxu0 0.0
    %956 = vmatpush1.msra.mxu0 0.0
    %957 = vmatprep.subr.mxu0 0.0
    %958 = vmatpush1.msra.mxu0 0.0
    %959 = vmatprep.subr.mxu0 0.0
    %960 = vmatpush1.msra.mxu0 0.0
    %961 = vmatprep.subr.mxu0 0.0
    %962 = vmatpush1.msra.mxu0 0.0
    %963 = vmatprep.subr.mxu0 0.0
    %964 = vmatpush1.msra.mxu0 0.0
    %965 = vmatprep.subr.mxu0 0.0
    %966 = vmatpush1.msra.mxu0 0.0
    %967 = vmatprep.subr.mxu0 0.0
    %968 = vmatpush1.msra.mxu0 0.0
    %969 = vmatprep.subr.mxu0 0.0
    %970 = vmatpush1.msra.mxu0 0.0
    %971 = vmatprep.subr.mxu0 0.0
    %972 = vmatpush1.msra.mxu0 0.0
    %973 = vmatprep.subr.mxu0 0.0
    %974 = vmatpush1.msra.mxu0 0.0
    %975 = vmatprep.subr.mxu0 0.0
    %976 = vmatpush1.msra.mxu0 0.0
    %977 = vmatprep.subr.mxu0 0.0
    %978 = vmatpush1.msra.mxu0 0.0
    %979 = vmatprep.subr.mxu0 0.0
    %980 = vmatpush1.msra.mxu0 0.0
    %981 = vmatprep.subr.mxu0 0.0
    %982 = vmatpush1.msra.mxu0 0.0
    %983 = vmatprep.subr.mxu0 0.0
    %984 = vmatpush1.msra.mxu0 0.0
    %985 = vmatprep.subr.mxu0 0.0
    %986 = vmatpush1.msra.mxu0 0.0
    %987 = vmatprep.subr.mxu0 0.0
    %988 = vmatpush1.msra.mxu0 0.0
    %989 = vmatprep.subr.mxu0 0.0
    %990 = vmatpush1.msra.mxu0 0.0
    %991 = vmatprep.subr.mxu0 0.0
    %992 = vmatpush1.msra.mxu0 0.0
    %993 = vmatprep.subr.mxu0 0.0
    %994 = vmatpush1.msra.mxu0 0.0
    %995 = vmatprep.subr.mxu0 0.0
    %996 = vmatpush1.msra.mxu0 0.0
    %997 = vmatprep.subr.mxu0 0.0
    %998 = vmatpush1.msra.mxu0 0.0
    %999 = vmatprep.subr.mxu0 0.0
    %1000 = vmatpush1.msra.mxu0 0.0
    %1001 = vmatprep.subr.mxu0 0.0
    %1002 = vmatpush1.msra.mxu0 0.0
    %1003 = vmatprep.mubr.f32.mxu0 0.0
    %v1004 = vand.u32 %v702, 4294901760
    %v1005 = vsub.f32 %v702, %v1004
    %1006 = vmatmul.mubr.f32.gmra.mrb[0].mxu0 %v1005
    %v1007 = vpop.f32.mrb[0].mxu0
    %v1008 = vadd.f32 %v910, %v1007
    %v1009 = vpop.f32.mrb[0].mxu0
    %1010 = vmatprep.mubr.f32.mxu0 0.0
    %v1011 = vand.u32 %v705, 4294901760
    %v1012 = vsub.f32 %v705, %v1011
    %1013 = vmatmul.mubr.f32.gmra.mrb[0].mxu0 %v1012
    %v1014 = vpop.f32.mrb[0].mxu0
    %v1015 = vadd.f32 %v916, %v1014
    %v1016 = vpop.f32.mrb[0].mxu0
    %1017 = vmatprep.mubr.f32.mxu0 0.0
    %v1018 = vand.u32 %v708, 4294901760
    %v1019 = vsub.f32 %v708, %v1018
    %1020 = vmatmul.mubr.f32.gmra.mrb[0].mxu0 %v1019
    %v1021 = vpop.f32.mrb[0].mxu0
    %v1022 = vadd.f32 %v922, %v1021
    %v1023 = vpop.f32.mrb[0].mxu0
    %1024 = vmatprep.mubr.f32.mxu0 0.0
    %v1025 = vand.u32 %v711, 4294901760
    %v1026 = vsub.f32 %v711, %v1025
    %1027 = vmatmul.mubr.f32.gmra.mrb[0].mxu0 %v1026
    %v1028 = vpop.f32.mrb[0].mxu0
    %v1029 = vadd.f32 %v928, %v1028
    %v1030 = vpop.f32.mrb[0].mxu0
    %1031 = vdwg.mxu0
    %1032 = vmatprep.subr.mxu0 0.0
    %v1033 = vand.u32 %v668, 4294901760
    %1034 = vmatpush1.msra.mxu0 %v1033
    %1035 = vmatprep.subr.mxu0 0.0
    %v1036 = vand.u32 %v669, 4294901760
    %1037 = vmatpush1.msra.mxu0 %v1036
    %1038 = vmatprep.subr.mxu0 0.0
    %v1039 = vand.u32 %v670, 4294901760
    %1040 = vmatpush1.msra.mxu0 %v1039
    %1041 = vmatprep.subr.mxu0 0.0
    %v1042 = vand.u32 %v671, 4294901760
    %1043 = vmatpush1.msra.mxu0 %v1042
    %1044 = vmatprep.subr.mxu0 0.0
    %1045 = vmatpush1.msra.mxu0 0.0
    %1046 = vmatprep.subr.mxu0 0.0
    %1047 = vmatpush1.msra.mxu0 0.0
    %1048 = vmatprep.subr.mxu0 0.0
    %1049 = vmatpush1.msra.mxu0 0.0
    %1050 = vmatprep.subr.mxu0 0.0
    %1051 = vmatpush1.msra.mxu0 0.0
    %1052 = vmatprep.subr.mxu0 0.0
    %1053 = vmatpush1.msra.mxu0 0.0
    %1054 = vmatprep.subr.mxu0 0.0
    %1055 = vmatpush1.msra.mxu0 0.0
    %1056 = vmatprep.subr.mxu0 0.0
    %1057 = vmatpush1.msra.mxu0 0.0
    %1058 = vmatprep.subr.mxu0 0.0
    %1059 = vmatpush1.msra.mxu0 0.0
    %1060 = vmatprep.subr.mxu0 0.0
    %1061 = vmatpush1.msra.mxu0 0.0
    %1062 = vmatprep.subr.mxu0 0.0
    %1063 = vmatpush1.msra.mxu0 0.0
    %1064 = vmatprep.subr.mxu0 0.0
    %1065 = vmatpush1.msra.mxu0 0.0
    %1066 = vmatprep.subr.mxu0 0.0
    %1067 = vmatpush1.msra.mxu0 0.0
    %1068 = vmatprep.subr.mxu0 0.0
    %1069 = vmatpush1.msra.mxu0 0.0
    %1070 = vmatprep.subr.mxu0 0.0
    %1071 = vmatpush1.msra.mxu0 0.0
    %1072 = vmatprep.subr.mxu0 0.0
    %1073 = vmatpush1.msra.mxu0 0.0
    %1074 = vmatprep.subr.mxu0 0.0
    %1075 = vmatpush1.msra.mxu0 0.0
    %1076 = vmatprep.subr.mxu0 0.0
    %1077 = vmatpush1.msra.mxu0 0.0
    %1078 = vmatprep.subr.mxu0 0.0
    %1079 = vmatpush1.msra.mxu0 0.0
    %1080 = vmatprep.subr.mxu0 0.0
    %1081 = vmatpush1.msra.mxu0 0.0
    %1082 = vmatprep.subr.mxu0 0.0
    %1083 = vmatpush1.msra.mxu0 0.0
    %1084 = vmatprep.subr.mxu0 0.0
    %1085 = vmatpush1.msra.mxu0 0.0
    %1086 = vmatprep.subr.mxu0 0.0
    %1087 = vmatpush1.msra.mxu0 0.0
    %1088 = vmatprep.subr.mxu0 0.0
    %1089 = vmatpush1.msra.mxu0 0.0
    %1090 = vmatprep.subr.mxu0 0.0
    %1091 = vmatpush1.msra.mxu0 0.0
    %1092 = vmatprep.subr.mxu0 0.0
    %1093 = vmatpush1.msra.mxu0 0.0
    %1094 = vmatprep.subr.mxu0 0.0
    %1095 = vmatpush1.msra.mxu0 0.0
    %1096 = vmatprep.subr.mxu0 0.0
    %1097 = vmatpush1.msra.mxu0 0.0
    %1098 = vmatprep.subr.mxu0 0.0
    %1099 = vmatpush1.msra.mxu0 0.0
    %1100 = vmatprep.mubr.f32.mxu0 0.0
    %v1101 = vand.u32 %v702, 4294901760
    %v1102 = vsub.f32 %v702, %v1101
    %v1103 = vand.u32 %v1102, 4294901760
    %1104 = vmatmul.mubr.f32.gmra.mrb[0].mxu0 %v1103
    %v1105 = vpop.f32.mrb[0].mxu0
    %v1106 = vadd.f32 %v1008, %v1105
    %v1107 = vpop.f32.mrb[0].mxu0
    %1108 = vmatprep.mubr.f32.mxu0 0.0
    %v1109 = vand.u32 %v705, 4294901760
    %v1110 = vsub.f32 %v705, %v1109
    %v1111 = vand.u32 %v1110, 4294901760
    %1112 = vmatmul.mubr.f32.gmra.mrb[0].mxu0 %v1111
    %v1113 = vpop.f32.mrb[0].mxu0
    %v1114 = vadd.f32 %v1015, %v1113
    %v1115 = vpop.f32.mrb[0].mxu0
    %1116 = vmatprep.mubr.f32.mxu0 0.0
    %v1117 = vand.u32 %v708, 4294901760
    %v1118 = vsub.f32 %v708, %v1117
    %v1119 = vand.u32 %v1118, 4294901760
    %1120 = vmatmul.mubr.f32.gmra.mrb[0].mxu0 %v1119
    %v1121 = vpop.f32.mrb[0].mxu0
    %v1122 = vadd.f32 %v1022, %v1121
    %v1123 = vpop.f32.mrb[0].mxu0
    %1124 = vmatprep.mubr.f32.mxu0 0.0
    %v1125 = vand.u32 %v711, 4294901760
    %v1126 = vsub.f32 %v711, %v1125
    %v1127 = vand.u32 %v1126, 4294901760
    %1128 = vmatmul.mubr.f32.gmra.mrb[0].mxu0 %v1127
    %v1129 = vpop.f32.mrb[0].mxu0
    %v1130 = vadd.f32 %v1029, %v1129
    %v1131 = vpop.f32.mrb[0].mxu0
    %1132 = vdwg.mxu0
    %1133 = vmatprep.subr.mxu0 0.0
    %v1134 = vand.u32 %v668, 4294901760
    %v1135 = vsub.f32 %v668, %v1134
    %v1136 = vand.u32 %v1135, 4294901760
    %1137 = vmatpush1.msra.mxu0 %v1136
    %1138 = vmatprep.subr.mxu0 0.0
    %v1139 = vand.u32 %v669, 4294901760
    %v1140 = vsub.f32 %v669, %v1139
    %v1141 = vand.u32 %v1140, 4294901760
    %1142 = vmatpush1.msra.mxu0 %v1141
    %1143 = vmatprep.subr.mxu0 0.0
    %v1144 = vand.u32 %v670, 4294901760
    %v1145 = vsub.f32 %v670, %v1144
    %v1146 = vand.u32 %v1145, 4294901760
    %1147 = vmatpush1.msra.mxu0 %v1146
    %1148 = vmatprep.subr.mxu0 0.0
    %v1149 = vand.u32 %v671, 4294901760
    %v1150 = vsub.f32 %v671, %v1149
    %v1151 = vand.u32 %v1150, 4294901760
    %1152 = vmatpush1.msra.mxu0 %v1151
    %1153 = vmatprep.subr.mxu0 0.0
    %1154 = vmatpush1.msra.mxu0 0.0
    %1155 = vmatprep.subr.mxu0 0.0
    %1156 = vmatpush1.msra.mxu0 0.0
    %1157 = vmatprep.subr.mxu0 0.0
    %1158 = vmatpush1.msra.mxu0 0.0
    %1159 = vmatprep.subr.mxu0 0.0
    %1160 = vmatpush1.msra.mxu0 0.0
    %1161 = vmatprep.subr.mxu0 0.0
    %1162 = vmatpush1.msra.mxu0 0.0
    %1163 = vmatprep.subr.mxu0 0.0
    %1164 = vmatpush1.msra.mxu0 0.0
    %1165 = vmatprep.subr.mxu0 0.0
    %1166 = vmatpush1.msra.mxu0 0.0
    %1167 = vmatprep.subr.mxu0 0.0
    %1168 = vmatpush1.msra.mxu0 0.0
    %1169 = vmatprep.subr.mxu0 0.0
    %1170 = vmatpush1.msra.mxu0 0.0
    %1171 = vmatprep.subr.mxu0 0.0
    %1172 = vmatpush1.msra.mxu0 0.0
    %1173 = vmatprep.subr.mxu0 0.0
    %1174 = vmatpush1.msra.mxu0 0.0
    %1175 = vmatprep.subr.mxu0 0.0
    %1176 = vmatpush1.msra.mxu0 0.0
    %1177 = vmatprep.subr.mxu0 0.0
    %1178 = vmatpush1.msra.mxu0 0.0
    %1179 = vmatprep.subr.mxu0 0.0
    %1180 = vmatpush1.msra.mxu0 0.0
    %1181 = vmatprep.subr.mxu0 0.0
    %1182 = vmatpush1.msra.mxu0 0.0
    %1183 = vmatprep.subr.mxu0 0.0
    %1184 = vmatpush1.msra.mxu0 0.0
    %1185 = vmatprep.subr.mxu0 0.0
    %1186 = vmatpush1.msra.mxu0 0.0
    %1187 = vmatprep.subr.mxu0 0.0
    %1188 = vmatpush1.msra.mxu0 0.0
    %1189 = vmatprep.subr.mxu0 0.0
    %1190 = vmatpush1.msra.mxu0 0.0
    %1191 = vmatprep.subr.mxu0 0.0
    %1192 = vmatpush1.msra.mxu0 0.0
    %1193 = vmatprep.subr.mxu0 0.0
    %1194 = vmatpush1.msra.mxu0 0.0
    %1195 = vmatprep.subr.mxu0 0.0
    %1196 = vmatpush1.msra.mxu0 0.0
    %1197 = vmatprep.subr.mxu0 0.0
    %1198 = vmatpush1.msra.mxu0 0.0
    %1199 = vmatprep.subr.mxu0 0.0
    %1200 = vmatpush1.msra.mxu0 0.0
    %1201 = vmatprep.subr.mxu0 0.0
    %1202 = vmatpush1.msra.mxu0 0.0
    %1203 = vmatprep.subr.mxu0 0.0
    %1204 = vmatpush1.msra.mxu0 0.0
    %1205 = vmatprep.subr.mxu0 0.0
    %1206 = vmatpush1.msra.mxu0 0.0
    %1207 = vmatprep.subr.mxu0 0.0
    %1208 = vmatpush1.msra.mxu0 0.0
    %1209 = vmatprep.mubr.f32.mxu0 0.0
    %v1210 = vand.u32 %v702, 4294901760
    %1211 = vmatmul.mubr.f32.gmra.mrb[0].mxu0 %v1210
    %v1212 = vpop.f32.mrb[0].mxu0
    %v1213 = vadd.f32 %v1106, %v1212
    %v1214 = vpop.f32.mrb[0].mxu0
    %1215 = vmatprep.mubr.f32.mxu0 0.0
    %v1216 = vand.u32 %v705, 4294901760
    %1217 = vmatmul.mubr.f32.gmra.mrb[0].mxu0 %v1216
    %v1218 = vpop.f32.mrb[0].mxu0
    %v1219 = vadd.f32 %v1114, %v1218
    %v1220 = vpop.f32.mrb[0].mxu0
    %1221 = vmatprep.mubr.f32.mxu0 0.0
    %v1222 = vand.u32 %v708, 4294901760
    %1223 = vmatmul.mubr.f32.gmra.mrb[0].mxu0 %v1222
    %v1224 = vpop.f32.mrb[0].mxu0
    %v1225 = vadd.f32 %v1122, %v1224
    %v1226 = vpop.f32.mrb[0].mxu0
    %1227 = vmatprep.mubr.f32.mxu0 0.0
    %v1228 = vand.u32 %v711, 4294901760
    %1229 = vmatmul.mubr.f32.gmra.mrb[0].mxu0 %v1228
    %v1230 = vpop.f32.mrb[0].mxu0
    %v1231 = vadd.f32 %v1130, %v1230
    %v1232 = vpop.f32.mrb[0].mxu0
    %1233 = vdwg.mxu0
    %1234 = vmatprep.subr.mxu0 0.0
    %v1235 = vand.u32 %v668, 4294901760
    %1236 = vmatpush1.msra.mxu0 %v1235
    %1237 = vmatprep.subr.mxu0 0.0
    %v1238 = vand.u32 %v669, 4294901760
    %1239 = vmatpush1.msra.mxu0 %v1238
    %1240 = vmatprep.subr.mxu0 0.0
    %v1241 = vand.u32 %v670, 4294901760
    %1242 = vmatpush1.msra.mxu0 %v1241
    %1243 = vmatprep.subr.mxu0 0.0
    %v1244 = vand.u32 %v671, 4294901760
    %1245 = vmatpush1.msra.mxu0 %v1244
    %1246 = vmatprep.subr.mxu0 0.0
    %1247 = vmatpush1.msra.mxu0 0.0
    %1248 = vmatprep.subr.mxu0 0.0
    %1249 = vmatpush1.msra.mxu0 0.0
    %1250 = vmatprep.subr.mxu0 0.0
    %1251 = vmatpush1.msra.mxu0 0.0
    %1252 = vmatprep.subr.mxu0 0.0
    %1253 = vmatpush1.msra.mxu0 0.0
    %1254 = vmatprep.subr.mxu0 0.0
    %1255 = vmatpush1.msra.mxu0 0.0
    %1256 = vmatprep.subr.mxu0 0.0
    %1257 = vmatpush1.msra.mxu0 0.0
    %1258 = vmatprep.subr.mxu0 0.0
    %1259 = vmatpush1.msra.mxu0 0.0
    %1260 = vmatprep.subr.mxu0 0.0
    %1261 = vmatpush1.msra.mxu0 0.0
    %1262 = vmatprep.subr.mxu0 0.0
    %1263 = vmatpush1.msra.mxu0 0.0
    %1264 = vmatprep.subr.mxu0 0.0
    %1265 = vmatpush1.msra.mxu0 0.0
    %1266 = vmatprep.subr.mxu0 0.0
    %1267 = vmatpush1.msra.mxu0 0.0
    %1268 = vmatprep.subr.mxu0 0.0
    %1269 = vmatpush1.msra.mxu0 0.0
    %1270 = vmatprep.subr.mxu0 0.0
    %1271 = vmatpush1.msra.mxu0 0.0
    %1272 = vmatprep.subr.mxu0 0.0
    %1273 = vmatpush1.msra.mxu0 0.0
    %1274 = vmatprep.subr.mxu0 0.0
    %1275 = vmatpush1.msra.mxu0 0.0
    %1276 = vmatprep.subr.mxu0 0.0
    %1277 = vmatpush1.msra.mxu0 0.0
    %1278 = vmatprep.subr.mxu0 0.0
    %1279 = vmatpush1.msra.mxu0 0.0
    %1280 = vmatprep.subr.mxu0 0.0
    %1281 = vmatpush1.msra.mxu0 0.0
    %1282 = vmatprep.subr.mxu0 0.0
    %1283 = vmatpush1.msra.mxu0 0.0
    %1284 = vmatprep.subr.mxu0 0.0
    %1285 = vmatpush1.msra.mxu0 0.0
    %1286 = vmatprep.subr.mxu0 0.0
    %1287 = vmatpush1.msra.mxu0 0.0
    %1288 = vmatprep.subr.mxu0 0.0
    %1289 = vmatpush1.msra.mxu0 0.0
    %1290 = vmatprep.subr.mxu0 0.0
    %1291 = vmatpush1.msra.mxu0 0.0
    %1292 = vmatprep.subr.mxu0 0.0
    %1293 = vmatpush1.msra.mxu0 0.0
    %1294 = vmatprep.subr.mxu0 0.0
    %1295 = vmatpush1.msra.mxu0 0.0
    %1296 = vmatprep.subr.mxu0 0.0
    %1297 = vmatpush1.msra.mxu0 0.0
    %1298 = vmatprep.subr.mxu0 0.0
    %1299 = vmatpush1.msra.mxu0 0.0
    %1300 = vmatprep.subr.mxu0 0.0
    %1301 = vmatpush1.msra.mxu0 0.0
    %1302 = vmatprep.mubr.f32.mxu0 0.0
    %v1303 = vand.u32 %v702, 4294901760
    %1304 = vmatmul.mubr.f32.gmra.mrb[0].mxu0 %v1303
    %v1305 = vpop.f32.mrb[0].mxu0
    %v1306 = vadd.f32 %v1213, %v1305
    %v1307 = vpop.f32.mrb[0].mxu0
    %1308 = vmatprep.mubr.f32.mxu0 0.0
    %v1309 = vand.u32 %v705, 4294901760
    %1310 = vmatmul.mubr.f32.gmra.mrb[0].mxu0 %v1309
    %v1311 = vpop.f32.mrb[0].mxu0
    %v1312 = vadd.f32 %v1219, %v1311
    %v1313 = vpop.f32.mrb[0].mxu0
    %1314 = vmatprep.mubr.f32.mxu0 0.0
    %v1315 = vand.u32 %v708, 4294901760
    %1316 = vmatmul.mubr.f32.gmra.mrb[0].mxu0 %v1315
    %v1317 = vpop.f32.mrb[0].mxu0
    %v1318 = vadd.f32 %v1225, %v1317
    %v1319 = vpop.f32.mrb[0].mxu0
    %1320 = vmatprep.mubr.f32.mxu0 0.0
    %v1321 = vand.u32 %v711, 4294901760
    %1322 = vmatmul.mubr.f32.gmra.mrb[0].mxu0 %v1321
    %v1323 = vpop.f32.mrb[0].mxu0
    %v1324 = vadd.f32 %v1231, %v1323
    %v1325 = vpop.f32.mrb[0].mxu0
    %1326 = vdwg.mxu0
    %vm1327 = vcmp.gt.f32.partialorder %v1306, 0.0
    %vm1328 = vcmp.gt.f32.partialorder %v1312, 0.0
    %vm1329 = vcmp.gt.f32.partialorder %v1318, 0.0
    %vm1330 = vcmp.gt.f32.partialorder %v1324, 0.0
    %v1331 = vmul.f32 %v1306, 0.01
    %v1332 = vmul.f32 %v1312, 0.01
    %v1333 = vmul.f32 %v1318, 0.01
    %v1334 = vmul.f32 %v1324, 0.01
    %v1335 = vsel %vm1327, %v1306, %v1331
    %v1336 = vsel %vm1328, %v1312, %v1332
    %v1337 = vsel %vm1329, %v1318, %v1333
    %v1338 = vsel %vm1330, %v1324, %v1334
    %v1339 = vld [vmem:[%s5] sm:$0x1]
    %v1340 = vld [vmem:[#allocation2] sm:$0x1]
    %1342 = vset.pattern.permute.xlu0 0
    %1343 = vperm.xlu0 %1342, %v1340
    %v1344 = vpop.permute.xlu0 %1343
    %v1346 = vlaneseq
    %v1347 = vshrl.u32 %v1346, 7
    %v1348 = vsub.s32 0, %v1347
    %v1349 = vrot.slane %v1344, %v1348
    %v1351 = vsel %vm700, %v1339, 0
    %1353 = vmatprep.subr.mxu0 0.0
    %v1354 = vand.u32 %v1335, 4294901760
    %1355 = vmatpush1.msra.mxu0 %v1354
    %1356 = vmatprep.subr.mxu0 0.0
    %v1357 = vand.u32 %v1336, 4294901760
    %1358 = vmatpush1.msra.mxu0 %v1357
    %1359 = vmatprep.subr.mxu0 0.0
    %v1360 = vand.u32 %v1337, 4294901760
    %1361 = vmatpush1.msra.mxu0 %v1360
    %1362 = vmatprep.subr.mxu0 0.0
    %v1363 = vand.u32 %v1338, 4294901760
    %1364 = vmatpush1.msra.mxu0 %v1363
    %1365 = vmatprep.subr.mxu0 0.0
    %1366 = vmatpush1.msra.mxu0 0.0
    %1367 = vmatprep.subr.mxu0 0.0
    %1368 = vmatpush1.msra.mxu0 0.0
    %1369 = vmatprep.subr.mxu0 0.0
    %1370 = vmatpush1.msra.mxu0 0.0
    %1371 = vmatprep.subr.mxu0 0.0
    %1372 = vmatpush1.msra.mxu0 0.0
    %1373 = vmatprep.subr.mxu0 0.0
    %1374 = vmatpush1.msra.mxu0 0.0
    %1375 = vmatprep.subr.mxu0 0.0
    %1376 = vmatpush1.msra.mxu0 0.0
    %1377 = vmatprep.subr.mxu0 0.0
    %1378 = vmatpush1.msra.mxu0 0.0
    %1379 = vmatprep.subr.mxu0 0.0
    %1380 = vmatpush1.msra.mxu0 0.0
    %1381 = vmatprep.subr.mxu0 0.0
    %1382 = vmatpush1.msra.mxu0 0.0
    %1383 = vmatprep.subr.mxu0 0.0
    %1384 = vmatpush1.msra.mxu0 0.0
    %1385 = vmatprep.subr.mxu0 0.0
    %1386 = vmatpush1.msra.mxu0 0.0
    %1387 = vmatprep.subr.mxu0 0.0
    %1388 = vmatpush1.msra.mxu0 0.0
    %1389 = vmatprep.subr.mxu0 0.0
    %1390 = vmatpush1.msra.mxu0 0.0
    %1391 = vmatprep.subr.mxu0 0.0
    %1392 = vmatpush1.msra.mxu0 0.0
    %1393 = vmatprep.subr.mxu0 0.0
    %1394 = vmatpush1.msra.mxu0 0.0
    %1395 = vmatprep.subr.mxu0 0.0
    %1396 = vmatpush1.msra.mxu0 0.0
    %1397 = vmatprep.subr.mxu0 0.0
    %1398 = vmatpush1.msra.mxu0 0.0
    %1399 = vmatprep.subr.mxu0 0.0
    %1400 = vmatpush1.msra.mxu0 0.0
    %1401 = vmatprep.subr.mxu0 0.0
    %1402 = vmatpush1.msra.mxu0 0.0
    %1403 = vmatprep.subr.mxu0 0.0
    %1404 = vmatpush1.msra.mxu0 0.0
    %1405 = vmatprep.subr.mxu0 0.0
    %1406 = vmatpush1.msra.mxu0 0.0
    %1407 = vmatprep.subr.mxu0 0.0
    %1408 = vmatpush1.msra.mxu0 0.0
    %1409 = vmatprep.subr.mxu0 0.0
    %1410 = vmatpush1.msra.mxu0 0.0
    %1411 = vmatprep.subr.mxu0 0.0
    %1412 = vmatpush1.msra.mxu0 0.0
    %1413 = vmatprep.subr.mxu0 0.0
    %1414 = vmatpush1.msra.mxu0 0.0
    %1415 = vmatprep.subr.mxu0 0.0
    %1416 = vmatpush1.msra.mxu0 0.0
    %1417 = vmatprep.subr.mxu0 0.0
    %1418 = vmatpush1.msra.mxu0 0.0
    %1419 = vmatprep.subr.mxu0 0.0
    %1420 = vmatpush1.msra.mxu0 0.0
    %1421 = vmatprep.mubr.f32.mxu0 0.0
    %v1422 = vand.u32 %v1351, 4294901760
    %v1423 = vsub.f32 %v1351, %v1422
    %v1424 = vand.u32 %v1423, 4294901760
    %v1425 = vsub.f32 %v1423, %v1424
    %v1426 = vand.u32 %v1425, 4294901760
    %1427 = vmatmul.mubr.f32.gmra.mrb[0].mxu0 %v1426
    %v1428 = vpop.f32.mrb[0].mxu0
    %v1429 = vadd.f32 %v1349, %v1428
    %v1430 = vpop.f32.mrb[0].mxu0
    %1431 = vdwg.mxu0
    %1432 = vmatprep.subr.mxu0 0.0
    %v1433 = vand.u32 %v1335, 4294901760
    %v1434 = vsub.f32 %v1335, %v1433
    %v1435 = vand.u32 %v1434, 4294901760
    %v1436 = vsub.f32 %v1434, %v1435
    %v1437 = vand.u32 %v1436, 4294901760
    %1438 = vmatpush1.msra.mxu0 %v1437
    %1439 = vmatprep.subr.mxu0 0.0
    %v1440 = vand.u32 %v1336, 4294901760
    %v1441 = vsub.f32 %v1336, %v1440
    %v1442 = vand.u32 %v1441, 4294901760
    %v1443 = vsub.f32 %v1441, %v1442
    %v1444 = vand.u32 %v1443, 4294901760
    %1445 = vmatpush1.msra.mxu0 %v1444
    %1446 = vmatprep.subr.mxu0 0.0
    %v1447 = vand.u32 %v1337, 4294901760
    %v1448 = vsub.f32 %v1337, %v1447
    %v1449 = vand.u32 %v1448, 4294901760
    %v1450 = vsub.f32 %v1448, %v1449
    %v1451 = vand.u32 %v1450, 4294901760
    %1452 = vmatpush1.msra.mxu0 %v1451
    %1453 = vmatprep.subr.mxu0 0.0
    %v1454 = vand.u32 %v1338, 4294901760
    %v1455 = vsub.f32 %v1338, %v1454
    %v1456 = vand.u32 %v1455, 4294901760
    %v1457 = vsub.f32 %v1455, %v1456
    %v1458 = vand.u32 %v1457, 4294901760
    %1459 = vmatpush1.msra.mxu0 %v1458
    %1460 = vmatprep.subr.mxu0 0.0
    %1461 = vmatpush1.msra.mxu0 0.0
    %1462 = vmatprep.subr.mxu0 0.0
    %1463 = vmatpush1.msra.mxu0 0.0
    %1464 = vmatprep.subr.mxu0 0.0
    %1465 = vmatpush1.msra.mxu0 0.0
    %1466 = vmatprep.subr.mxu0 0.0
    %1467 = vmatpush1.msra.mxu0 0.0
    %1468 = vmatprep.subr.mxu0 0.0
    %1469 = vmatpush1.msra.mxu0 0.0
    %1470 = vmatprep.subr.mxu0 0.0
    %1471 = vmatpush1.msra.mxu0 0.0
    %1472 = vmatprep.subr.mxu0 0.0
    %1473 = vmatpush1.msra.mxu0 0.0
    %1474 = vmatprep.subr.mxu0 0.0
    %1475 = vmatpush1.msra.mxu0 0.0
    %1476 = vmatprep.subr.mxu0 0.0
    %1477 = vmatpush1.msra.mxu0 0.0
    %1478 = vmatprep.subr.mxu0 0.0
    %1479 = vmatpush1.msra.mxu0 0.0
    %1480 = vmatprep.subr.mxu0 0.0
    %1481 = vmatpush1.msra.mxu0 0.0
    %1482 = vmatprep.subr.mxu0 0.0
    %1483 = vmatpush1.msra.mxu0 0.0
    %1484 = vmatprep.subr.mxu0 0.0
    %1485 = vmatpush1.msra.mxu0 0.0
    %1486 = vmatprep.subr.mxu0 0.0
    %1487 = vmatpush1.msra.mxu0 0.0
    %1488 = vmatprep.subr.mxu0 0.0
    %1489 = vmatpush1.msra.mxu0 0.0
    %1490 = vmatprep.subr.mxu0 0.0
    %1491 = vmatpush1.msra.mxu0 0.0
    %1492 = vmatprep.subr.mxu0 0.0
    %1493 = vmatpush1.msra.mxu0 0.0
    %1494 = vmatprep.subr.mxu0 0.0
    %1495 = vmatpush1.msra.mxu0 0.0
    %1496 = vmatprep.subr.mxu0 0.0
    %1497 = vmatpush1.msra.mxu0 0.0
    %1498 = vmatprep.subr.mxu0 0.0
    %1499 = vmatpush1.msra.mxu0 0.0
    %1500 = vmatprep.subr.mxu0 0.0
    %1501 = vmatpush1.msra.mxu0 0.0
    %1502 = vmatprep.subr.mxu0 0.0
    %1503 = vmatpush1.msra.mxu0 0.0
    %1504 = vmatprep.subr.mxu0 0.0
    %1505 = vmatpush1.msra.mxu0 0.0
    %1506 = vmatprep.subr.mxu0 0.0
    %1507 = vmatpush1.msra.mxu0 0.0
    %1508 = vmatprep.subr.mxu0 0.0
    %1509 = vmatpush1.msra.mxu0 0.0
    %1510 = vmatprep.subr.mxu0 0.0
    %1511 = vmatpush1.msra.mxu0 0.0
    %1512 = vmatprep.subr.mxu0 0.0
    %1513 = vmatpush1.msra.mxu0 0.0
    %1514 = vmatprep.subr.mxu0 0.0
    %1515 = vmatpush1.msra.mxu0 0.0
    %1516 = vmatprep.mubr.f32.mxu0 0.0
    %v1517 = vand.u32 %v1351, 4294901760
    %1518 = vmatmul.mubr.f32.gmra.mrb[0].mxu0 %v1517
    %v1519 = vpop.f32.mrb[0].mxu0
    %v1520 = vadd.f32 %v1429, %v1519
    %v1521 = vpop.f32.mrb[0].mxu0
    %1522 = vdwg.mxu0
    %1523 = vmatprep.subr.mxu0 0.0
    %v1524 = vand.u32 %v1335, 4294901760
    %v1525 = vsub.f32 %v1335, %v1524
    %1526 = vmatpush1.msra.mxu0 %v1525
    %1527 = vmatprep.subr.mxu0 0.0
    %v1528 = vand.u32 %v1336, 4294901760
    %v1529 = vsub.f32 %v1336, %v1528
    %1530 = vmatpush1.msra.mxu0 %v1529
    %1531 = vmatprep.subr.mxu0 0.0
    %v1532 = vand.u32 %v1337, 4294901760
    %v1533 = vsub.f32 %v1337, %v1532
    %1534 = vmatpush1.msra.mxu0 %v1533
    %1535 = vmatprep.subr.mxu0 0.0
    %v1536 = vand.u32 %v1338, 4294901760
    %v1537 = vsub.f32 %v1338, %v1536
    %1538 = vmatpush1.msra.mxu0 %v1537
    %1539 = vmatprep.subr.mxu0 0.0
    %1540 = vmatpush1.msra.mxu0 0.0
    %1541 = vmatprep.subr.mxu0 0.0
    %1542 = vmatpush1.msra.mxu0 0.0
    %1543 = vmatprep.subr.mxu0 0.0
    %1544 = vmatpush1.msra.mxu0 0.0
    %1545 = vmatprep.subr.mxu0 0.0
    %1546 = vmatpush1.msra.mxu0 0.0
    %1547 = vmatprep.subr.mxu0 0.0
    %1548 = vmatpush1.msra.mxu0 0.0
    %1549 = vmatprep.subr.mxu0 0.0
    %1550 = vmatpush1.msra.mxu0 0.0
    %1551 = vmatprep.subr.mxu0 0.0
    %1552 = vmatpush1.msra.mxu0 0.0
    %1553 = vmatprep.subr.mxu0 0.0
    %1554 = vmatpush1.msra.mxu0 0.0
    %1555 = vmatprep.subr.mxu0 0.0
    %1556 = vmatpush1.msra.mxu0 0.0
    %1557 = vmatprep.subr.mxu0 0.0
    %1558 = vmatpush1.msra.mxu0 0.0
    %1559 = vmatprep.subr.mxu0 0.0
    %1560 = vmatpush1.msra.mxu0 0.0
    %1561 = vmatprep.subr.mxu0 0.0
    %1562 = vmatpush1.msra.mxu0 0.0
    %1563 = vmatprep.subr.mxu0 0.0
    %1564 = vmatpush1.msra.mxu0 0.0
    %1565 = vmatprep.subr.mxu0 0.0
    %1566 = vmatpush1.msra.mxu0 0.0
    %1567 = vmatprep.subr.mxu0 0.0
    %1568 = vmatpush1.msra.mxu0 0.0
    %1569 = vmatprep.subr.mxu0 0.0
    %1570 = vmatpush1.msra.mxu0 0.0
    %1571 = vmatprep.subr.mxu0 0.0
    %1572 = vmatpush1.msra.mxu0 0.0
    %1573 = vmatprep.subr.mxu0 0.0
    %1574 = vmatpush1.msra.mxu0 0.0
    %1575 = vmatprep.subr.mxu0 0.0
    %1576 = vmatpush1.msra.mxu0 0.0
    %1577 = vmatprep.subr.mxu0 0.0
    %1578 = vmatpush1.msra.mxu0 0.0
    %1579 = vmatprep.subr.mxu0 0.0
    %1580 = vmatpush1.msra.mxu0 0.0
    %1581 = vmatprep.subr.mxu0 0.0
    %1582 = vmatpush1.msra.mxu0 0.0
    %1583 = vmatprep.subr.mxu0 0.0
    %1584 = vmatpush1.msra.mxu0 0.0
    %1585 = vmatprep.subr.mxu0 0.0
    %1586 = vmatpush1.msra.mxu0 0.0
    %1587 = vmatprep.subr.mxu0 0.0
    %1588 = vmatpush1.msra.mxu0 0.0
    %1589 = vmatprep.subr.mxu0 0.0
    %1590 = vmatpush1.msra.mxu0 0.0
    %1591 = vmatprep.subr.mxu0 0.0
    %1592 = vmatpush1.msra.mxu0 0.0
    %1593 = vmatprep.subr.mxu0 0.0
    %1594 = vmatpush1.msra.mxu0 0.0
    %1595 = vmatprep.mubr.f32.mxu0 0.0
    %v1596 = vand.u32 %v1351, 4294901760
    %v1597 = vsub.f32 %v1351, %v1596
    %1598 = vmatmul.mubr.f32.gmra.mrb[0].mxu0 %v1597
    %v1599 = vpop.f32.mrb[0].mxu0
    %v1600 = vadd.f32 %v1520, %v1599
    %v1601 = vpop.f32.mrb[0].mxu0
    %1602 = vdwg.mxu0
    %1603 = vmatprep.subr.mxu0 0.0
    %v1604 = vand.u32 %v1335, 4294901760
    %1605 = vmatpush1.msra.mxu0 %v1604
    %1606 = vmatprep.subr.mxu0 0.0
    %v1607 = vand.u32 %v1336, 4294901760
    %1608 = vmatpush1.msra.mxu0 %v1607
    %1609 = vmatprep.subr.mxu0 0.0
    %v1610 = vand.u32 %v1337, 4294901760
    %1611 = vmatpush1.msra.mxu0 %v1610
    %1612 = vmatprep.subr.mxu0 0.0
    %v1613 = vand.u32 %v1338, 4294901760
    %1614 = vmatpush1.msra.mxu0 %v1613
    %1615 = vmatprep.subr.mxu0 0.0
    %1616 = vmatpush1.msra.mxu0 0.0
    %1617 = vmatprep.subr.mxu0 0.0
    %1618 = vmatpush1.msra.mxu0 0.0
    %1619 = vmatprep.subr.mxu0 0.0
    %1620 = vmatpush1.msra.mxu0 0.0
    %1621 = vmatprep.subr.mxu0 0.0
    %1622 = vmatpush1.msra.mxu0 0.0
    %1623 = vmatprep.subr.mxu0 0.0
    %1624 = vmatpush1.msra.mxu0 0.0
    %1625 = vmatprep.subr.mxu0 0.0
    %1626 = vmatpush1.msra.mxu0 0.0
    %1627 = vmatprep.subr.mxu0 0.0
    %1628 = vmatpush1.msra.mxu0 0.0
    %1629 = vmatprep.subr.mxu0 0.0
    %1630 = vmatpush1.msra.mxu0 0.0
    %1631 = vmatprep.subr.mxu0 0.0
    %1632 = vmatpush1.msra.mxu0 0.0
    %1633 = vmatprep.subr.mxu0 0.0
    %1634 = vmatpush1.msra.mxu0 0.0
    %1635 = vmatprep.subr.mxu0 0.0
    %1636 = vmatpush1.msra.mxu0 0.0
    %1637 = vmatprep.subr.mxu0 0.0
    %1638 = vmatpush1.msra.mxu0 0.0
    %1639 = vmatprep.subr.mxu0 0.0
    %1640 = vmatpush1.msra.mxu0 0.0
    %1641 = vmatprep.subr.mxu0 0.0
    %1642 = vmatpush1.msra.mxu0 0.0
    %1643 = vmatprep.subr.mxu0 0.0
    %1644 = vmatpush1.msra.mxu0 0.0
    %1645 = vmatprep.subr.mxu0 0.0
    %1646 = vmatpush1.msra.mxu0 0.0
    %1647 = vmatprep.subr.mxu0 0.0
    %1648 = vmatpush1.msra.mxu0 0.0
    %1649 = vmatprep.subr.mxu0 0.0
    %1650 = vmatpush1.msra.mxu0 0.0
    %1651 = vmatprep.subr.mxu0 0.0
    %1652 = vmatpush1.msra.mxu0 0.0
    %1653 = vmatprep.subr.mxu0 0.0
    %1654 = vmatpush1.msra.mxu0 0.0
    %1655 = vmatprep.subr.mxu0 0.0
    %1656 = vmatpush1.msra.mxu0 0.0
    %1657 = vmatprep.subr.mxu0 0.0
    %1658 = vmatpush1.msra.mxu0 0.0
    %1659 = vmatprep.subr.mxu0 0.0
    %1660 = vmatpush1.msra.mxu0 0.0
    %1661 = vmatprep.subr.mxu0 0.0
    %1662 = vmatpush1.msra.mxu0 0.0
    %1663 = vmatprep.subr.mxu0 0.0
    %1664 = vmatpush1.msra.mxu0 0.0
    %1665 = vmatprep.subr.mxu0 0.0
    %1666 = vmatpush1.msra.mxu0 0.0
    %1667 = vmatprep.subr.mxu0 0.0
    %1668 = vmatpush1.msra.mxu0 0.0
    %1669 = vmatprep.subr.mxu0 0.0
    %1670 = vmatpush1.msra.mxu0 0.0
    %1671 = vmatprep.mubr.f32.mxu0 0.0
    %v1672 = vand.u32 %v1351, 4294901760
    %v1673 = vsub.f32 %v1351, %v1672
    %v1674 = vand.u32 %v1673, 4294901760
    %1675 = vmatmul.mubr.f32.gmra.mrb[0].mxu0 %v1674
    %v1676 = vpop.f32.mrb[0].mxu0
    %v1677 = vadd.f32 %v1600, %v1676
    %v1678 = vpop.f32.mrb[0].mxu0
    %1679 = vdwg.mxu0
    %1680 = vmatprep.subr.mxu0 0.0
    %v1681 = vand.u32 %v1335, 4294901760
    %v1682 = vsub.f32 %v1335, %v1681
    %v1683 = vand.u32 %v1682, 4294901760
    %1684 = vmatpush1.msra.mxu0 %v1683
    %1685 = vmatprep.subr.mxu0 0.0
    %v1686 = vand.u32 %v1336, 4294901760
    %v1687 = vsub.f32 %v1336, %v1686
    %v1688 = vand.u32 %v1687, 4294901760
    %1689 = vmatpush1.msra.mxu0 %v1688
    %1690 = vmatprep.subr.mxu0 0.0
    %v1691 = vand.u32 %v1337, 4294901760
    %v1692 = vsub.f32 %v1337, %v1691
    %v1693 = vand.u32 %v1692, 4294901760
    %1694 = vmatpush1.msra.mxu0 %v1693
    %1695 = vmatprep.subr.mxu0 0.0
    %v1696 = vand.u32 %v1338, 4294901760
    %v1697 = vsub.f32 %v1338, %v1696
    %v1698 = vand.u32 %v1697, 4294901760
    %1699 = vmatpush1.msra.mxu0 %v1698
    %1700 = vmatprep.subr.mxu0 0.0
    %1701 = vmatpush1.msra.mxu0 0.0
    %1702 = vmatprep.subr.mxu0 0.0
    %1703 = vmatpush1.msra.mxu0 0.0
    %1704 = vmatprep.subr.mxu0 0.0
    %1705 = vmatpush1.msra.mxu0 0.0
    %1706 = vmatprep.subr.mxu0 0.0
    %1707 = vmatpush1.msra.mxu0 0.0
    %1708 = vmatprep.subr.mxu0 0.0
    %1709 = vmatpush1.msra.mxu0 0.0
    %1710 = vmatprep.subr.mxu0 0.0
    %1711 = vmatpush1.msra.mxu0 0.0
    %1712 = vmatprep.subr.mxu0 0.0
    %1713 = vmatpush1.msra.mxu0 0.0
    %1714 = vmatprep.subr.mxu0 0.0
    %1715 = vmatpush1.msra.mxu0 0.0
    %1716 = vmatprep.subr.mxu0 0.0
    %1717 = vmatpush1.msra.mxu0 0.0
    %1718 = vmatprep.subr.mxu0 0.0
    %1719 = vmatpush1.msra.mxu0 0.0
    %1720 = vmatprep.subr.mxu0 0.0
    %1721 = vmatpush1.msra.mxu0 0.0
    %1722 = vmatprep.subr.mxu0 0.0
    %1723 = vmatpush1.msra.mxu0 0.0
    %1724 = vmatprep.subr.mxu0 0.0
    %1725 = vmatpush1.msra.mxu0 0.0
    %1726 = vmatprep.subr.mxu0 0.0
    %1727 = vmatpush1.msra.mxu0 0.0
    %1728 = vmatprep.subr.mxu0 0.0
    %1729 = vmatpush1.msra.mxu0 0.0
    %1730 = vmatprep.subr.mxu0 0.0
    %1731 = vmatpush1.msra.mxu0 0.0
    %1732 = vmatprep.subr.mxu0 0.0
    %1733 = vmatpush1.msra.mxu0 0.0
    %1734 = vmatprep.subr.mxu0 0.0
    %1735 = vmatpush1.msra.mxu0 0.0
    %1736 = vmatprep.subr.mxu0 0.0
    %1737 = vmatpush1.msra.mxu0 0.0
    %1738 = vmatprep.subr.mxu0 0.0
    %1739 = vmatpush1.msra.mxu0 0.0
    %1740 = vmatprep.subr.mxu0 0.0
    %1741 = vmatpush1.msra.mxu0 0.0
    %1742 = vmatprep.subr.mxu0 0.0
    %1743 = vmatpush1.msra.mxu0 0.0
    %1744 = vmatprep.subr.mxu0 0.0
    %1745 = vmatpush1.msra.mxu0 0.0
    %1746 = vmatprep.subr.mxu0 0.0
    %1747 = vmatpush1.msra.mxu0 0.0
    %1748 = vmatprep.subr.mxu0 0.0
    %1749 = vmatpush1.msra.mxu0 0.0
    %1750 = vmatprep.subr.mxu0 0.0
    %1751 = vmatpush1.msra.mxu0 0.0
    %1752 = vmatprep.subr.mxu0 0.0
    %1753 = vmatpush1.msra.mxu0 0.0
    %1754 = vmatprep.subr.mxu0 0.0
    %1755 = vmatpush1.msra.mxu0 0.0
    %1756 = vmatprep.mubr.f32.mxu0 0.0
    %v1757 = vand.u32 %v1351, 4294901760
    %1758 = vmatmul.mubr.f32.gmra.mrb[0].mxu0 %v1757
    %v1759 = vpop.f32.mrb[0].mxu0
    %v1760 = vadd.f32 %v1677, %v1759
    %v1761 = vpop.f32.mrb[0].mxu0
    %1762 = vdwg.mxu0
    %1763 = vmatprep.subr.mxu0 0.0
    %v1764 = vand.u32 %v1335, 4294901760
    %1765 = vmatpush1.msra.mxu0 %v1764
    %1766 = vmatprep.subr.mxu0 0.0
    %v1767 = vand.u32 %v1336, 4294901760
    %1768 = vmatpush1.msra.mxu0 %v1767
    %1769 = vmatprep.subr.mxu0 0.0
    %v1770 = vand.u32 %v1337, 4294901760
    %1771 = vmatpush1.msra.mxu0 %v1770
    %1772 = vmatprep.subr.mxu0 0.0
    %v1773 = vand.u32 %v1338, 4294901760
    %1774 = vmatpush1.msra.mxu0 %v1773
    %1775 = vmatprep.subr.mxu0 0.0
    %1776 = vmatpush1.msra.mxu0 0.0
    %1777 = vmatprep.subr.mxu0 0.0
    %1778 = vmatpush1.msra.mxu0 0.0
    %1779 = vmatprep.subr.mxu0 0.0
    %1780 = vmatpush1.msra.mxu0 0.0
    %1781 = vmatprep.subr.mxu0 0.0
    %1782 = vmatpush1.msra.mxu0 0.0
    %1783 = vmatprep.subr.mxu0 0.0
    %1784 = vmatpush1.msra.mxu0 0.0
    %1785 = vmatprep.subr.mxu0 0.0
    %1786 = vmatpush1.msra.mxu0 0.0
    %1787 = vmatprep.subr.mxu0 0.0
    %1788 = vmatpush1.msra.mxu0 0.0
    %1789 = vmatprep.subr.mxu0 0.0
    %1790 = vmatpush1.msra.mxu0 0.0
    %1791 = vmatprep.subr.mxu0 0.0
    %1792 = vmatpush1.msra.mxu0 0.0
    %1793 = vmatprep.subr.mxu0 0.0
    %1794 = vmatpush1.msra.mxu0 0.0
    %1795 = vmatprep.subr.mxu0 0.0
    %1796 = vmatpush1.msra.mxu0 0.0
    %1797 = vmatprep.subr.mxu0 0.0
    %1798 = vmatpush1.msra.mxu0 0.0
    %1799 = vmatprep.subr.mxu0 0.0
    %1800 = vmatpush1.msra.mxu0 0.0
    %1801 = vmatprep.subr.mxu0 0.0
    %1802 = vmatpush1.msra.mxu0 0.0
    %1803 = vmatprep.subr.mxu0 0.0
    %1804 = vmatpush1.msra.mxu0 0.0
    %1805 = vmatprep.subr.mxu0 0.0
    %1806 = vmatpush1.msra.mxu0 0.0
    %1807 = vmatprep.subr.mxu0 0.0
    %1808 = vmatpush1.msra.mxu0 0.0
    %1809 = vmatprep.subr.mxu0 0.0
    %1810 = vmatpush1.msra.mxu0 0.0
    %1811 = vmatprep.subr.mxu0 0.0
    %1812 = vmatpush1.msra.mxu0 0.0
    %1813 = vmatprep.subr.mxu0 0.0
    %1814 = vmatpush1.msra.mxu0 0.0
    %1815 = vmatprep.subr.mxu0 0.0
    %1816 = vmatpush1.msra.mxu0 0.0
    %1817 = vmatprep.subr.mxu0 0.0
    %1818 = vmatpush1.msra.mxu0 0.0
    %1819 = vmatprep.subr.mxu0 0.0
    %1820 = vmatpush1.msra.mxu0 0.0
    %1821 = vmatprep.subr.mxu0 0.0
    %1822 = vmatpush1.msra.mxu0 0.0
    %1823 = vmatprep.subr.mxu0 0.0
    %1824 = vmatpush1.msra.mxu0 0.0
    %1825 = vmatprep.subr.mxu0 0.0
    %1826 = vmatpush1.msra.mxu0 0.0
    %1827 = vmatprep.subr.mxu0 0.0
    %1828 = vmatpush1.msra.mxu0 0.0
    %1829 = vmatprep.subr.mxu0 0.0
    %1830 = vmatpush1.msra.mxu0 0.0
    %1831 = vmatprep.mubr.f32.mxu0 0.0
    %v1832 = vand.u32 %v1351, 4294901760
    %1833 = vmatmul.mubr.f32.gmra.mrb[0].mxu0 %v1832
    %v1834 = vpop.f32.mrb[0].mxu0
    %v1835 = vadd.f32 %v1760, %v1834
    %v1836 = vpop.f32.mrb[0].mxu0
    %1837 = vdwg.mxu0
    %vm1838 = vcmask 57344
    %1839 = vst.msk [vmem:[#allocation3] sm:$0x1] %vm1838, %v1835
    // Predicated region
    $region30: #{tpu_custom_call.1} parent=1 // pred_check
      _
    $region31: #{tpu_custom_call.1} parent=1 // pred_check_branch
      %1841 = sbr.rel (0) target = $region33
    $region32: #{tpu_custom_call.1} parent=1 // pred_region
      %s1843 = ssub.s32 16, 16
      %1844 = vsyncadd [#allocation4], %s1843
      %s1846 = sshll.u32 [#allocation3], 4
      %s1847 = int_to_ptr.vmem [resolvable:$true] %s1846
      %1849 = dma.vmem_to_hbm [thread:$0]  %s1847, 16, %s7, [#allocation4]
    $region33: #{tpu_custom_call.1} parent=1 // pred_fallthru
      _
    // Predicated region
    $region34: #{tpu_custom_call.1} parent=1 // pred_check
      _
    $region35: #{tpu_custom_call.1} parent=1 // pred_check_branch
      %1851 = sbr.rel (0) target = $region37
    $region36: #{tpu_custom_call.1} parent=1 // pred_region
      %1852 = dma.done [#allocation4], 16
    $region37: #{tpu_custom_call.1} parent=1 // pred_fallthru
      _
    %1853 = vsyncpa [#allocation4], 1

</llo_original>
